<compile_context>
chip_gen: v5e
topology: v5e:2x2
jax: 0.10.0
libtpu: 0.0.40
codegen_flags: <defaults>
</compile_context>

<pallas_src>
import functools

import jax
import jax.numpy as jnp
from jax.experimental import pallas as pl
from jax.experimental.pallas import tpu as pltpu


def _fusion_kernel(xc_ref, xf_ref,
                   wg_ref, bgx_ref,
                   wx_ref,
                   wpsi_ref, bpsi_ref,
                   wtop_ref, wbot_ref, bconv_ref,
                   out_ref, psi_ref, *, C):
    """One (image, pixel-chunk) tile in lane-dense [C, pixels] layout."""
    xc_b = xc_ref[0].astype(jnp.float32)          # (C, tile_p)
    xf_b = xf_ref[0].astype(jnp.float32)          # (C, tile_p)
    xc = [xc_b[c:c + 1, :] for c in range(C)]     # per-channel (1, tile_p) rows
    xf = [xf_b[c:c + 1, :] for c in range(C)]

    # a = relu( BN(Conv1x1(X_c)) + BN(Conv1x1(X_f)) )   (BN folded into W, b)
    a = []
    for co in range(C):
        s = xc[0] * wg_ref[co] + xf[0] * wx_ref[co] + bgx_ref[co]
        for ci in range(1, C):
            s = s + xc[ci] * wg_ref[ci * C + co] + xf[ci] * wx_ref[ci * C + co]
        a.append(jnp.maximum(s, 0.0))

    # psi = sigmoid( BN(Conv1x1(a)) )  -> single channel, (1, tile_p)
    p = a[0] * wpsi_ref[0] + bpsi_ref[0]
    for ci in range(1, C):
        p = p + a[ci] * wpsi_ref[ci]
    psi = jax.nn.sigmoid(p)
    psi_ref[0] = psi.astype(psi_ref.dtype)

    # out = relu( BN(Conv1x1(concat([X_c, X_f*psi], channel))) )
    # concat never materialized: weight split into top (X_c) / bottom (gated X_f).
    xfg = [xf[ci] * psi for ci in range(C)]
    out_rows = []
    for co in range(C):
        s = xc[0] * wtop_ref[co] + xfg[0] * wbot_ref[co] + bconv_ref[co]
        for ci in range(1, C):
            s = s + xc[ci] * wtop_ref[ci * C + co] + xfg[ci] * wbot_ref[ci * C + co]
        out_rows.append(jnp.maximum(s, 0.0))
    out_ref[0] = jnp.concatenate(out_rows, axis=0).astype(out_ref.dtype)


def _fold_bn(w, b, gamma, beta, mean, var, eps=1e-5):
    """Fold eval-mode BatchNorm into a preceding (C_in, C_out) linear map."""
    scale = gamma / jnp.sqrt(var + eps)           # (C_out,)
    w_eff = w * scale[None, :]
    b_eff = (b - mean) * scale + beta
    return w_eff, b_eff


def multi_scale_fusion(x_c, x_f, params, *, max_tile_p=8192):
    """x_c, x_f: NCHW float32 arrays of identical shape [N, C, H, W]."""
    N, C, H, W = x_c.shape
    P = H * W
    LANE = 128
    P_pad = ((P + LANE - 1) // LANE) * LANE       # lane-dense pixel axis

    # NCHW is already [C, pixels]-major: this reshape is free (no HBM transpose).
    xc3 = x_c.reshape(N, C, P)
    xf3 = x_f.reshape(N, C, P)
    if P_pad != P:
        pad = ((0, 0), (0, 0), (0, P_pad - P))
        xc3 = jnp.pad(xc3, pad)
        xf3 = jnp.pad(xf3, pad)

    # Largest 128-multiple pixel tile (<= max_tile_p) dividing P_pad.
    # Per-tile VMEM footprint stays small (< ~1 MiB double-buffered even at
    # tile_p = 8192), well inside the scoped-VMEM default on v5e/v6e/v7x.
    tile_p = min(P_pad, max_tile_p)
    while P_pad % tile_p != 0:
        tile_p -= LANE

    # Fold eval-mode BN into each 1x1 conv; split the concat-conv weight.
    wg, bg = _fold_bn(params["wg"], params["bg"], *params["bn_g"])
    wx, bx = _fold_bn(params["wx"], params["bx"], *params["bn_x"])
    wpsi, bpsi = _fold_bn(params["wpsi"], params["bpsi"], *params["bn_psi"])
    wconv, bconv = _fold_bn(params["wconv"], params["bconv"], *params["bn_conv"])
    wtop, wbot = wconv[:C], wconv[C:]

    # Flatten the tiny weights for SMEM scalar access: w[ci, co] -> flat[ci*C+co].
    smem_args = (wg.reshape(-1), bg + bx,
                 wx.reshape(-1),
                 wpsi.reshape(-1), bpsi.reshape(-1),
                 wtop.reshape(-1), wbot.reshape(-1), bconv)

    grid = (N, P_pad // tile_p)

    def tile_spec(c):
        return pl.BlockSpec((1, c, tile_p), lambda n, p: (n, 0, p))

    smem_spec = pl.BlockSpec(memory_space=pltpu.MemorySpace.SMEM)

    # TODO(synk): a bf16 I/O variant (halve HBM traffic on v6e/v7x, math kept in
    # f32) is the next lever for this memory-bound op; kept f32 so the forward
    # matches the PyTorch float32 module.
    out3, psi3 = pl.pallas_call(
        functools.partial(_fusion_kernel, C=C),
        out_shape=(
            jax.ShapeDtypeStruct((N, C, P_pad), jnp.float32),
            jax.ShapeDtypeStruct((N, 1, P_pad), jnp.float32),
        ),
        grid_spec=pltpu.PrefetchScalarGridSpec(
            num_scalar_prefetch=0,
            grid=grid,
            in_specs=[tile_spec(C), tile_spec(C)] + [smem_spec] * 8,
            out_specs=(tile_spec(C), tile_spec(1)),
        ),
        compiler_params=pltpu.CompilerParams(
            dimension_semantics=("parallel", "parallel")),
    )(xc3, xf3, *smem_args)

    out = out3[:, :, :P].reshape(N, C, H, W)
    psi = psi3[:, :, :P].reshape(N, 1, H, W)
    return out, psi


def init_params(key, C):
    """Deterministic synthetic parameters matching the PyTorch module shapes.
    Conv weights are stored as (C_in, C_out) so the math is x @ W."""
    ks = jax.random.split(key, 8)
    s = 0.5

    def bn_default(c):
        # (gamma, beta, running_mean, running_var) -- eval-mode defaults
        return (jnp.ones((c,), jnp.float32), jnp.zeros((c,), jnp.float32),
                jnp.zeros((c,), jnp.float32), jnp.ones((c,), jnp.float32))

    return {
        "wg":    s * jax.random.normal(ks[0], (C, C), jnp.float32),
        "bg":    s * jax.random.normal(ks[1], (C,), jnp.float32),
        "bn_g":  bn_default(C),
        "wx":    s * jax.random.normal(ks[2], (C, C), jnp.float32),
        "bx":    s * jax.random.normal(ks[3], (C,), jnp.float32),
        "bn_x":  bn_default(C),
        "wpsi":  s * jax.random.normal(ks[4], (C, 1), jnp.float32),
        "bpsi":  s * jax.random.normal(ks[5], (1,), jnp.float32),
        "bn_psi": bn_default(1),
        "wconv": s * jax.random.normal(ks[6], (2 * C, C), jnp.float32),
        "bconv": s * jax.random.normal(ks[7], (C,), jnp.float32),
        "bn_conv": bn_default(C),
    }


def _reference(x_c, x_f, params):
    """Pure-JAX reference of the same forward (for a sanity check)."""
    N, C, H, W = x_c.shape
    xc = jnp.transpose(x_c, (0, 2, 3, 1)).reshape(-1, C)
    xf = jnp.transpose(x_f, (0, 2, 3, 1)).reshape(-1, C)
    wg, bg = _fold_bn(params["wg"], params["bg"], *params["bn_g"])
    wx, bx = _fold_bn(params["wx"], params["bx"], *params["bn_x"])
    wpsi, bpsi = _fold_bn(params["wpsi"], params["bpsi"], *params["bn_psi"])
    wconv, bconv = _fold_bn(params["wconv"], params["bconv"], *params["bn_conv"])
    g1 = xc @ wg + bg
    x1 = xf @ wx + bx
    a = jnp.maximum(g1 + x1, 0.0)
    psi = jax.nn.sigmoid(a @ wpsi + bpsi)
    cat = jnp.concatenate([xc, xf * psi], axis=-1)
    out = jnp.maximum(cat @ wconv + bconv, 0.0)
    out = jnp.transpose(out.reshape(N, H, W, C), (0, 3, 1, 2))
    psi = jnp.transpose(psi.reshape(N, H, W, 1), (0, 3, 1, 2))
    return out, psi


if __name__ == "__main__":
    key = jax.random.PRNGKey(0)
    k_xc, k_xf, k_p = jax.random.split(key, 3)

    N, C, H, W = 2, 4, 16, 16            # NCHW, matches the PyTorch module
    x_c = jax.random.normal(k_xc, (N, C, H, W), jnp.float32)
    x_f = jax.random.normal(k_xf, (N, C, H, W), jnp.float32)
    params = init_params(k_p, C)

    out, psi = multi_scale_fusion(x_c, x_f, params)
    out, psi = jax.block_until_ready((out, psi))

    out_ref, psi_ref = _reference(x_c, x_f, params)
    assert out.shape == (N, C, H, W) and psi.shape == (N, 1, H, W)
    assert jnp.allclose(out, out_ref, atol=1e-5, rtol=1e-5)
    assert jnp.allclose(psi, psi_ref, atol=1e-5, rtol=1e-5)

    print("KERNEL_OK")
</pallas_src>

<mosaic_0001>
module attributes {stable_mosaic.version = 11 : i64} {
  func.func @_fusion_kernel(%arg0: i32, %arg1: i32, %arg2: memref<1x4x256xf32, #tpu.memory_space<vmem>>, %arg3: memref<1x4x256xf32, #tpu.memory_space<vmem>>, %arg4: memref<16xf32, #tpu.memory_space<smem>>, %arg5: memref<4xf32, #tpu.memory_space<smem>>, %arg6: memref<16xf32, #tpu.memory_space<smem>>, %arg7: memref<4xf32, #tpu.memory_space<smem>>, %arg8: memref<1xf32, #tpu.memory_space<smem>>, %arg9: memref<16xf32, #tpu.memory_space<smem>>, %arg10: memref<16xf32, #tpu.memory_space<smem>>, %arg11: memref<4xf32, #tpu.memory_space<smem>>, %arg12: memref<1x4x256xf32, #tpu.memory_space<vmem>>, %arg13: memref<1x1x256xf32, #tpu.memory_space<vmem>>) attributes {dimension_semantics = [#tpu.dimension_semantics<parallel>, #tpu.dimension_semantics<parallel>], iteration_bounds = array<i64: 2, 1>, scalar_prefetch = 0 : i64, scratch_operands = 0 : i64, tpu.core_type = #tpu.core_type<tc>, window_params = [{transform_indices = @transform_0, window_bounds = array<i64: 1, 4, 256>}, {transform_indices = @transform_1, window_bounds = array<i64: 1, 4, 256>}, {transform_indices = @transform_2, window_bounds = array<i64: 16>}, {transform_indices = @transform_3, window_bounds = array<i64: 4>}, {transform_indices = @transform_4, window_bounds = array<i64: 16>}, {transform_indices = @transform_5, window_bounds = array<i64: 4>}, {transform_indices = @transform_6, window_bounds = array<i64: 1>}, {transform_indices = @transform_7, window_bounds = array<i64: 16>}, {transform_indices = @transform_8, window_bounds = array<i64: 16>}, {transform_indices = @transform_9, window_bounds = array<i64: 4>}, {transform_indices = @transform_10, window_bounds = array<i64: 1, 4, 256>}, {transform_indices = @transform_11, window_bounds = array<i64: 1, 1, 256>}]} {
    %c0 = arith.constant 0 : index
    %c0_0 = arith.constant 0 : index
    %c0_1 = arith.constant 0 : index
    %0 = vector.load %arg2[%c0, %c0_0, %c0_1] : memref<1x4x256xf32, #tpu.memory_space<vmem>>, vector<1x4x256xf32>
    %1 = vector.shape_cast %0 : vector<1x4x256xf32> to vector<4x256xf32>
    %c0_2 = arith.constant 0 : index
    %c0_3 = arith.constant 0 : index
    %c0_4 = arith.constant 0 : index
    %2 = vector.load %arg3[%c0_2, %c0_3, %c0_4] : memref<1x4x256xf32, #tpu.memory_space<vmem>>, vector<1x4x256xf32>
    %3 = vector.shape_cast %2 : vector<1x4x256xf32> to vector<4x256xf32>
    %4 = vector.extract_strided_slice %1 {offsets = [0, 0], sizes = [1, 256], strides = [1, 1]} : vector<4x256xf32> to vector<1x256xf32>
    %5 = vector.extract_strided_slice %1 {offsets = [1, 0], sizes = [1, 256], strides = [1, 1]} : vector<4x256xf32> to vector<1x256xf32>
    %6 = vector.extract_strided_slice %1 {offsets = [2, 0], sizes = [1, 256], strides = [1, 1]} : vector<4x256xf32> to vector<1x256xf32>
    %7 = vector.extract_strided_slice %1 {offsets = [3, 0], sizes = [1, 256], strides = [1, 1]} : vector<4x256xf32> to vector<1x256xf32>
    %8 = vector.extract_strided_slice %3 {offsets = [0, 0], sizes = [1, 256], strides = [1, 1]} : vector<4x256xf32> to vector<1x256xf32>
    %9 = vector.extract_strided_slice %3 {offsets = [1, 0], sizes = [1, 256], strides = [1, 1]} : vector<4x256xf32> to vector<1x256xf32>
    %10 = vector.extract_strided_slice %3 {offsets = [2, 0], sizes = [1, 256], strides = [1, 1]} : vector<4x256xf32> to vector<1x256xf32>
    %11 = vector.extract_strided_slice %3 {offsets = [3, 0], sizes = [1, 256], strides = [1, 1]} : vector<4x256xf32> to vector<1x256xf32>
    %c0_5 = arith.constant 0 : index
    %12 = memref.load %arg4[%c0_5] : memref<16xf32, #tpu.memory_space<smem>>
    %13 = vector.broadcast %12 : f32 to vector<1x256xf32>
    %14 = arith.mulf %4, %13 : vector<1x256xf32>
    %c0_6 = arith.constant 0 : index
    %15 = memref.load %arg6[%c0_6] : memref<16xf32, #tpu.memory_space<smem>>
    %16 = vector.broadcast %15 : f32 to vector<1x256xf32>
    %17 = arith.mulf %8, %16 : vector<1x256xf32>
    %18 = arith.addf %14, %17 : vector<1x256xf32>
    %c0_7 = arith.constant 0 : index
    %19 = memref.load %arg5[%c0_7] : memref<4xf32, #tpu.memory_space<smem>>
    %20 = vector.broadcast %19 : f32 to vector<1x256xf32>
    %21 = arith.addf %18, %20 : vector<1x256xf32>
    %c4 = arith.constant 4 : index
    %22 = memref.load %arg4[%c4] : memref<16xf32, #tpu.memory_space<smem>>
    %23 = vector.broadcast %22 : f32 to vector<1x256xf32>
    %24 = arith.mulf %5, %23 : vector<1x256xf32>
    %25 = arith.addf %21, %24 : vector<1x256xf32>
    %c4_8 = arith.constant 4 : index
    %26 = memref.load %arg6[%c4_8] : memref<16xf32, #tpu.memory_space<smem>>
    %27 = vector.broadcast %26 : f32 to vector<1x256xf32>
    %28 = arith.mulf %9, %27 : vector<1x256xf32>
    %29 = arith.addf %25, %28 : vector<1x256xf32>
    %c8 = arith.constant 8 : index
    %30 = memref.load %arg4[%c8] : memref<16xf32, #tpu.memory_space<smem>>
    %31 = vector.broadcast %30 : f32 to vector<1x256xf32>
    %32 = arith.mulf %6, %31 : vector<1x256xf32>
    %33 = arith.addf %29, %32 : vector<1x256xf32>
    %c8_9 = arith.constant 8 : index
    %34 = memref.load %arg6[%c8_9] : memref<16xf32, #tpu.memory_space<smem>>
    %35 = vector.broadcast %34 : f32 to vector<1x256xf32>
    %36 = arith.mulf %10, %35 : vector<1x256xf32>
    %37 = arith.addf %33, %36 : vector<1x256xf32>
    %c12 = arith.constant 12 : index
    %38 = memref.load %arg4[%c12] : memref<16xf32, #tpu.memory_space<smem>>
    %39 = vector.broadcast %38 : f32 to vector<1x256xf32>
    %40 = arith.mulf %7, %39 : vector<1x256xf32>
    %41 = arith.addf %37, %40 : vector<1x256xf32>
    %c12_10 = arith.constant 12 : index
    %42 = memref.load %arg6[%c12_10] : memref<16xf32, #tpu.memory_space<smem>>
    %43 = vector.broadcast %42 : f32 to vector<1x256xf32>
    %44 = arith.mulf %11, %43 : vector<1x256xf32>
    %45 = arith.addf %41, %44 : vector<1x256xf32>
    %cst = arith.constant 0.000000e+00 : f32
    %46 = vector.broadcast %cst : f32 to vector<1x256xf32>
    %47 = arith.maximumf %45, %46 : vector<1x256xf32>
    %c1 = arith.constant 1 : index
    %48 = memref.load %arg4[%c1] : memref<16xf32, #tpu.memory_space<smem>>
    %49 = vector.broadcast %48 : f32 to vector<1x256xf32>
    %50 = arith.mulf %4, %49 : vector<1x256xf32>
    %c1_11 = arith.constant 1 : index
    %51 = memref.load %arg6[%c1_11] : memref<16xf32, #tpu.memory_space<smem>>
    %52 = vector.broadcast %51 : f32 to vector<1x256xf32>
    %53 = arith.mulf %8, %52 : vector<1x256xf32>
    %54 = arith.addf %50, %53 : vector<1x256xf32>
    %c1_12 = arith.constant 1 : index
    %55 = memref.load %arg5[%c1_12] : memref<4xf32, #tpu.memory_space<smem>>
    %56 = vector.broadcast %55 : f32 to vector<1x256xf32>
    %57 = arith.addf %54, %56 : vector<1x256xf32>
    %c5 = arith.constant 5 : index
    %58 = memref.load %arg4[%c5] : memref<16xf32, #tpu.memory_space<smem>>
    %59 = vector.broadcast %58 : f32 to vector<1x256xf32>
    %60 = arith.mulf %5, %59 : vector<1x256xf32>
    %61 = arith.addf %57, %60 : vector<1x256xf32>
    %c5_13 = arith.constant 5 : index
    %62 = memref.load %arg6[%c5_13] : memref<16xf32, #tpu.memory_space<smem>>
    %63 = vector.broadcast %62 : f32 to vector<1x256xf32>
    %64 = arith.mulf %9, %63 : vector<1x256xf32>
    %65 = arith.addf %61, %64 : vector<1x256xf32>
    %c9 = arith.constant 9 : index
    %66 = memref.load %arg4[%c9] : memref<16xf32, #tpu.memory_space<smem>>
    %67 = vector.broadcast %66 : f32 to vector<1x256xf32>
    %68 = arith.mulf %6, %67 : vector<1x256xf32>
    %69 = arith.addf %65, %68 : vector<1x256xf32>
    %c9_14 = arith.constant 9 : index
    %70 = memref.load %arg6[%c9_14] : memref<16xf32, #tpu.memory_space<smem>>
    %71 = vector.broadcast %70 : f32 to vector<1x256xf32>
    %72 = arith.mulf %10, %71 : vector<1x256xf32>
    %73 = arith.addf %69, %72 : vector<1x256xf32>
    %c13 = arith.constant 13 : index
    %74 = memref.load %arg4[%c13] : memref<16xf32, #tpu.memory_space<smem>>
    %75 = vector.broadcast %74 : f32 to vector<1x256xf32>
    %76 = arith.mulf %7, %75 : vector<1x256xf32>
    %77 = arith.addf %73, %76 : vector<1x256xf32>
    %c13_15 = arith.constant 13 : index
    %78 = memref.load %arg6[%c13_15] : memref<16xf32, #tpu.memory_space<smem>>
    %79 = vector.broadcast %78 : f32 to vector<1x256xf32>
    %80 = arith.mulf %11, %79 : vector<1x256xf32>
    %81 = arith.addf %77, %80 : vector<1x256xf32>
    %cst_16 = arith.constant 0.000000e+00 : f32
    %82 = vector.broadcast %cst_16 : f32 to vector<1x256xf32>
    %83 = arith.maximumf %81, %82 : vector<1x256xf32>
    %c2 = arith.constant 2 : index
    %84 = memref.load %arg4[%c2] : memref<16xf32, #tpu.memory_space<smem>>
    %85 = vector.broadcast %84 : f32 to vector<1x256xf32>
    %86 = arith.mulf %4, %85 : vector<1x256xf32>
    %c2_17 = arith.constant 2 : index
    %87 = memref.load %arg6[%c2_17] : memref<16xf32, #tpu.memory_space<smem>>
    %88 = vector.broadcast %87 : f32 to vector<1x256xf32>
    %89 = arith.mulf %8, %88 : vector<1x256xf32>
    %90 = arith.addf %86, %89 : vector<1x256xf32>
    %c2_18 = arith.constant 2 : index
    %91 = memref.load %arg5[%c2_18] : memref<4xf32, #tpu.memory_space<smem>>
    %92 = vector.broadcast %91 : f32 to vector<1x256xf32>
    %93 = arith.addf %90, %92 : vector<1x256xf32>
    %c6 = arith.constant 6 : index
    %94 = memref.load %arg4[%c6] : memref<16xf32, #tpu.memory_space<smem>>
    %95 = vector.broadcast %94 : f32 to vector<1x256xf32>
    %96 = arith.mulf %5, %95 : vector<1x256xf32>
    %97 = arith.addf %93, %96 : vector<1x256xf32>
    %c6_19 = arith.constant 6 : index
    %98 = memref.load %arg6[%c6_19] : memref<16xf32, #tpu.memory_space<smem>>
    %99 = vector.broadcast %98 : f32 to vector<1x256xf32>
    %100 = arith.mulf %9, %99 : vector<1x256xf32>
    %101 = arith.addf %97, %100 : vector<1x256xf32>
    %c10 = arith.constant 10 : index
    %102 = memref.load %arg4[%c10] : memref<16xf32, #tpu.memory_space<smem>>
    %103 = vector.broadcast %102 : f32 to vector<1x256xf32>
    %104 = arith.mulf %6, %103 : vector<1x256xf32>
    %105 = arith.addf %101, %104 : vector<1x256xf32>
    %c10_20 = arith.constant 10 : index
    %106 = memref.load %arg6[%c10_20] : memref<16xf32, #tpu.memory_space<smem>>
    %107 = vector.broadcast %106 : f32 to vector<1x256xf32>
    %108 = arith.mulf %10, %107 : vector<1x256xf32>
    %109 = arith.addf %105, %108 : vector<1x256xf32>
    %c14 = arith.constant 14 : index
    %110 = memref.load %arg4[%c14] : memref<16xf32, #tpu.memory_space<smem>>
    %111 = vector.broadcast %110 : f32 to vector<1x256xf32>
    %112 = arith.mulf %7, %111 : vector<1x256xf32>
    %113 = arith.addf %109, %112 : vector<1x256xf32>
    %c14_21 = arith.constant 14 : index
    %114 = memref.load %arg6[%c14_21] : memref<16xf32, #tpu.memory_space<smem>>
    %115 = vector.broadcast %114 : f32 to vector<1x256xf32>
    %116 = arith.mulf %11, %115 : vector<1x256xf32>
    %117 = arith.addf %113, %116 : vector<1x256xf32>
    %cst_22 = arith.constant 0.000000e+00 : f32
    %118 = vector.broadcast %cst_22 : f32 to vector<1x256xf32>
    %119 = arith.maximumf %117, %118 : vector<1x256xf32>
    %c3 = arith.constant 3 : index
    %120 = memref.load %arg4[%c3] : memref<16xf32, #tpu.memory_space<smem>>
    %121 = vector.broadcast %120 : f32 to vector<1x256xf32>
    %122 = arith.mulf %4, %121 : vector<1x256xf32>
    %c3_23 = arith.constant 3 : index
    %123 = memref.load %arg6[%c3_23] : memref<16xf32, #tpu.memory_space<smem>>
    %124 = vector.broadcast %123 : f32 to vector<1x256xf32>
    %125 = arith.mulf %8, %124 : vector<1x256xf32>
    %126 = arith.addf %122, %125 : vector<1x256xf32>
    %c3_24 = arith.constant 3 : index
    %127 = memref.load %arg5[%c3_24] : memref<4xf32, #tpu.memory_space<smem>>
    %128 = vector.broadcast %127 : f32 to vector<1x256xf32>
    %129 = arith.addf %126, %128 : vector<1x256xf32>
    %c7 = arith.constant 7 : index
    %130 = memref.load %arg4[%c7] : memref<16xf32, #tpu.memory_space<smem>>
    %131 = vector.broadcast %130 : f32 to vector<1x256xf32>
    %132 = arith.mulf %5, %131 : vector<1x256xf32>
    %133 = arith.addf %129, %132 : vector<1x256xf32>
    %c7_25 = arith.constant 7 : index
    %134 = memref.load %arg6[%c7_25] : memref<16xf32, #tpu.memory_space<smem>>
    %135 = vector.broadcast %134 : f32 to vector<1x256xf32>
    %136 = arith.mulf %9, %135 : vector<1x256xf32>
    %137 = arith.addf %133, %136 : vector<1x256xf32>
    %c11 = arith.constant 11 : index
    %138 = memref.load %arg4[%c11] : memref<16xf32, #tpu.memory_space<smem>>
    %139 = vector.broadcast %138 : f32 to vector<1x256xf32>
    %140 = arith.mulf %6, %139 : vector<1x256xf32>
    %141 = arith.addf %137, %140 : vector<1x256xf32>
    %c11_26 = arith.constant 11 : index
    %142 = memref.load %arg6[%c11_26] : memref<16xf32, #tpu.memory_space<smem>>
    %143 = vector.broadcast %142 : f32 to vector<1x256xf32>
    %144 = arith.mulf %10, %143 : vector<1x256xf32>
    %145 = arith.addf %141, %144 : vector<1x256xf32>
    %c15 = arith.constant 15 : index
    %146 = memref.load %arg4[%c15] : memref<16xf32, #tpu.memory_space<smem>>
    %147 = vector.broadcast %146 : f32 to vector<1x256xf32>
    %148 = arith.mulf %7, %147 : vector<1x256xf32>
    %149 = arith.addf %145, %148 : vector<1x256xf32>
    %c15_27 = arith.constant 15 : index
    %150 = memref.load %arg6[%c15_27] : memref<16xf32, #tpu.memory_space<smem>>
    %151 = vector.broadcast %150 : f32 to vector<1x256xf32>
    %152 = arith.mulf %11, %151 : vector<1x256xf32>
    %153 = arith.addf %149, %152 : vector<1x256xf32>
    %cst_28 = arith.constant 0.000000e+00 : f32
    %154 = vector.broadcast %cst_28 : f32 to vector<1x256xf32>
    %155 = arith.maximumf %153, %154 : vector<1x256xf32>
    %c0_29 = arith.constant 0 : index
    %156 = memref.load %arg7[%c0_29] : memref<4xf32, #tpu.memory_space<smem>>
    %157 = vector.broadcast %156 : f32 to vector<1x256xf32>
    %158 = arith.mulf %47, %157 : vector<1x256xf32>
    %c0_30 = arith.constant 0 : index
    %159 = memref.load %arg8[%c0_30] : memref<1xf32, #tpu.memory_space<smem>>
    %160 = vector.broadcast %159 : f32 to vector<1x256xf32>
    %161 = arith.addf %158, %160 : vector<1x256xf32>
    %c1_31 = arith.constant 1 : index
    %162 = memref.load %arg7[%c1_31] : memref<4xf32, #tpu.memory_space<smem>>
    %163 = vector.broadcast %162 : f32 to vector<1x256xf32>
    %164 = arith.mulf %83, %163 : vector<1x256xf32>
    %165 = arith.addf %161, %164 : vector<1x256xf32>
    %c2_32 = arith.constant 2 : index
    %166 = memref.load %arg7[%c2_32] : memref<4xf32, #tpu.memory_space<smem>>
    %167 = vector.broadcast %166 : f32 to vector<1x256xf32>
    %168 = arith.mulf %119, %167 : vector<1x256xf32>
    %169 = arith.addf %165, %168 : vector<1x256xf32>
    %c3_33 = arith.constant 3 : index
    %170 = memref.load %arg7[%c3_33] : memref<4xf32, #tpu.memory_space<smem>>
    %171 = vector.broadcast %170 : f32 to vector<1x256xf32>
    %172 = arith.mulf %155, %171 : vector<1x256xf32>
    %173 = arith.addf %169, %172 : vector<1x256xf32>
    %174 = arith.negf %173 : vector<1x256xf32>
    %175 = math.exp %174 : vector<1x256xf32>
    %cst_34 = arith.constant 1.000000e+00 : f32
    %176 = vector.broadcast %cst_34 : f32 to vector<1x256xf32>
    %177 = arith.addf %176, %175 : vector<1x256xf32>
    %178 = arith.divf %176, %177 : vector<1x256xf32>
    %c0_35 = arith.constant 0 : index
    %c0_36 = arith.constant 0 : index
    %c0_37 = arith.constant 0 : index
    %179 = vector.load %arg13[%c0_35, %c0_36, %c0_37] : memref<1x1x256xf32, #tpu.memory_space<vmem>>, vector<1x1x256xf32>
    %180 = vector.shape_cast %179 : vector<1x1x256xf32> to vector<1x256xf32>
    %181 = vector.shape_cast %178 : vector<1x256xf32> to vector<1x1x256xf32>
    tpu.vector_store %arg13[%c0_35, %c0_36, %c0_37], %181 {strides = array<i32>} : memref<1x1x256xf32, #tpu.memory_space<vmem>>, vector<1x1x256xf32>,
    %182 = arith.mulf %8, %178 : vector<1x256xf32>
    %183 = arith.mulf %9, %178 : vector<1x256xf32>
    %184 = arith.mulf %10, %178 : vector<1x256xf32>
    %185 = arith.mulf %11, %178 : vector<1x256xf32>
    %c0_38 = arith.constant 0 : index
    %186 = memref.load %arg9[%c0_38] : memref<16xf32, #tpu.memory_space<smem>>
    %187 = vector.broadcast %186 : f32 to vector<1x256xf32>
    %188 = arith.mulf %4, %187 : vector<1x256xf32>
    %c0_39 = arith.constant 0 : index
    %189 = memref.load %arg10[%c0_39] : memref<16xf32, #tpu.memory_space<smem>>
    %190 = vector.broadcast %189 : f32 to vector<1x256xf32>
    %191 = arith.mulf %182, %190 : vector<1x256xf32>
    %192 = arith.addf %188, %191 : vector<1x256xf32>
    %c0_40 = arith.constant 0 : index
    %193 = memref.load %arg11[%c0_40] : memref<4xf32, #tpu.memory_space<smem>>
    %194 = vector.broadcast %193 : f32 to vector<1x256xf32>
    %195 = arith.addf %192, %194 : vector<1x256xf32>
    %c4_41 = arith.constant 4 : index
    %196 = memref.load %arg9[%c4_41] : memref<16xf32, #tpu.memory_space<smem>>
    %197 = vector.broadcast %196 : f32 to vector<1x256xf32>
    %198 = arith.mulf %5, %197 : vector<1x256xf32>
    %199 = arith.addf %195, %198 : vector<1x256xf32>
    %c4_42 = arith.constant 4 : index
    %200 = memref.load %arg10[%c4_42] : memref<16xf32, #tpu.memory_space<smem>>
    %201 = vector.broadcast %200 : f32 to vector<1x256xf32>
    %202 = arith.mulf %183, %201 : vector<1x256xf32>
    %203 = arith.addf %199, %202 : vector<1x256xf32>
    %c8_43 = arith.constant 8 : index
    %204 = memref.load %arg9[%c8_43] : memref<16xf32, #tpu.memory_space<smem>>
    %205 = vector.broadcast %204 : f32 to vector<1x256xf32>
    %206 = arith.mulf %6, %205 : vector<1x256xf32>
    %207 = arith.addf %203, %206 : vector<1x256xf32>
    %c8_44 = arith.constant 8 : index
    %208 = memref.load %arg10[%c8_44] : memref<16xf32, #tpu.memory_space<smem>>
    %209 = vector.broadcast %208 : f32 to vector<1x256xf32>
    %210 = arith.mulf %184, %209 : vector<1x256xf32>
    %211 = arith.addf %207, %210 : vector<1x256xf32>
    %c12_45 = arith.constant 12 : index
    %212 = memref.load %arg9[%c12_45] : memref<16xf32, #tpu.memory_space<smem>>
    %213 = vector.broadcast %212 : f32 to vector<1x256xf32>
    %214 = arith.mulf %7, %213 : vector<1x256xf32>
    %215 = arith.addf %211, %214 : vector<1x256xf32>
    %c12_46 = arith.constant 12 : index
    %216 = memref.load %arg10[%c12_46] : memref<16xf32, #tpu.memory_space<smem>>
    %217 = vector.broadcast %216 : f32 to vector<1x256xf32>
    %218 = arith.mulf %185, %217 : vector<1x256xf32>
    %219 = arith.addf %215, %218 : vector<1x256xf32>
    %cst_47 = arith.constant 0.000000e+00 : f32
    %220 = vector.broadcast %cst_47 : f32 to vector<1x256xf32>
    %221 = arith.maximumf %219, %220 : vector<1x256xf32>
    %c1_48 = arith.constant 1 : index
    %222 = memref.load %arg9[%c1_48] : memref<16xf32, #tpu.memory_space<smem>>
    %223 = vector.broadcast %222 : f32 to vector<1x256xf32>
    %224 = arith.mulf %4, %223 : vector<1x256xf32>
    %c1_49 = arith.constant 1 : index
    %225 = memref.load %arg10[%c1_49] : memref<16xf32, #tpu.memory_space<smem>>
    %226 = vector.broadcast %225 : f32 to vector<1x256xf32>
    %227 = arith.mulf %182, %226 : vector<1x256xf32>
    %228 = arith.addf %224, %227 : vector<1x256xf32>
    %c1_50 = arith.constant 1 : index
    %229 = memref.load %arg11[%c1_50] : memref<4xf32, #tpu.memory_space<smem>>
    %230 = vector.broadcast %229 : f32 to vector<1x256xf32>
    %231 = arith.addf %228, %230 : vector<1x256xf32>
    %c5_51 = arith.constant 5 : index
    %232 = memref.load %arg9[%c5_51] : memref<16xf32, #tpu.memory_space<smem>>
    %233 = vector.broadcast %232 : f32 to vector<1x256xf32>
    %234 = arith.mulf %5, %233 : vector<1x256xf32>
    %235 = arith.addf %231, %234 : vector<1x256xf32>
    %c5_52 = arith.constant 5 : index
    %236 = memref.load %arg10[%c5_52] : memref<16xf32, #tpu.memory_space<smem>>
    %237 = vector.broadcast %236 : f32 to vector<1x256xf32>
    %238 = arith.mulf %183, %237 : vector<1x256xf32>
    %239 = arith.addf %235, %238 : vector<1x256xf32>
    %c9_53 = arith.constant 9 : index
    %240 = memref.load %arg9[%c9_53] : memref<16xf32, #tpu.memory_space<smem>>
    %241 = vector.broadcast %240 : f32 to vector<1x256xf32>
    %242 = arith.mulf %6, %241 : vector<1x256xf32>
    %243 = arith.addf %239, %242 : vector<1x256xf32>
    %c9_54 = arith.constant 9 : index
    %244 = memref.load %arg10[%c9_54] : memref<16xf32, #tpu.memory_space<smem>>
    %245 = vector.broadcast %244 : f32 to vector<1x256xf32>
    %246 = arith.mulf %184, %245 : vector<1x256xf32>
    %247 = arith.addf %243, %246 : vector<1x256xf32>
    %c13_55 = arith.constant 13 : index
    %248 = memref.load %arg9[%c13_55] : memref<16xf32, #tpu.memory_space<smem>>
    %249 = vector.broadcast %248 : f32 to vector<1x256xf32>
    %250 = arith.mulf %7, %249 : vector<1x256xf32>
    %251 = arith.addf %247, %250 : vector<1x256xf32>
    %c13_56 = arith.constant 13 : index
    %252 = memref.load %arg10[%c13_56] : memref<16xf32, #tpu.memory_space<smem>>
    %253 = vector.broadcast %252 : f32 to vector<1x256xf32>
    %254 = arith.mulf %185, %253 : vector<1x256xf32>
    %255 = arith.addf %251, %254 : vector<1x256xf32>
    %cst_57 = arith.constant 0.000000e+00 : f32
    %256 = vector.broadcast %cst_57 : f32 to vector<1x256xf32>
    %257 = arith.maximumf %255, %256 : vector<1x256xf32>
    %c2_58 = arith.constant 2 : index
    %258 = memref.load %arg9[%c2_58] : memref<16xf32, #tpu.memory_space<smem>>
    %259 = vector.broadcast %258 : f32 to vector<1x256xf32>
    %260 = arith.mulf %4, %259 : vector<1x256xf32>
    %c2_59 = arith.constant 2 : index
    %261 = memref.load %arg10[%c2_59] : memref<16xf32, #tpu.memory_space<smem>>
    %262 = vector.broadcast %261 : f32 to vector<1x256xf32>
    %263 = arith.mulf %182, %262 : vector<1x256xf32>
    %264 = arith.addf %260, %263 : vector<1x256xf32>
    %c2_60 = arith.constant 2 : index
    %265 = memref.load %arg11[%c2_60] : memref<4xf32, #tpu.memory_space<smem>>
    %266 = vector.broadcast %265 : f32 to vector<1x256xf32>
    %267 = arith.addf %264, %266 : vector<1x256xf32>
    %c6_61 = arith.constant 6 : index
    %268 = memref.load %arg9[%c6_61] : memref<16xf32, #tpu.memory_space<smem>>
    %269 = vector.broadcast %268 : f32 to vector<1x256xf32>
    %270 = arith.mulf %5, %269 : vector<1x256xf32>
    %271 = arith.addf %267, %270 : vector<1x256xf32>
    %c6_62 = arith.constant 6 : index
    %272 = memref.load %arg10[%c6_62] : memref<16xf32, #tpu.memory_space<smem>>
    %273 = vector.broadcast %272 : f32 to vector<1x256xf32>
    %274 = arith.mulf %183, %273 : vector<1x256xf32>
    %275 = arith.addf %271, %274 : vector<1x256xf32>
    %c10_63 = arith.constant 10 : index
    %276 = memref.load %arg9[%c10_63] : memref<16xf32, #tpu.memory_space<smem>>
    %277 = vector.broadcast %276 : f32 to vector<1x256xf32>
    %278 = arith.mulf %6, %277 : vector<1x256xf32>
    %279 = arith.addf %275, %278 : vector<1x256xf32>
    %c10_64 = arith.constant 10 : index
    %280 = memref.load %arg10[%c10_64] : memref<16xf32, #tpu.memory_space<smem>>
    %281 = vector.broadcast %280 : f32 to vector<1x256xf32>
    %282 = arith.mulf %184, %281 : vector<1x256xf32>
    %283 = arith.addf %279, %282 : vector<1x256xf32>
    %c14_65 = arith.constant 14 : index
    %284 = memref.load %arg9[%c14_65] : memref<16xf32, #tpu.memory_space<smem>>
    %285 = vector.broadcast %284 : f32 to vector<1x256xf32>
    %286 = arith.mulf %7, %285 : vector<1x256xf32>
    %287 = arith.addf %283, %286 : vector<1x256xf32>
    %c14_66 = arith.constant 14 : index
    %288 = memref.load %arg10[%c14_66] : memref<16xf32, #tpu.memory_space<smem>>
    %289 = vector.broadcast %288 : f32 to vector<1x256xf32>
    %290 = arith.mulf %185, %289 : vector<1x256xf32>
    %291 = arith.addf %287, %290 : vector<1x256xf32>
    %cst_67 = arith.constant 0.000000e+00 : f32
    %292 = vector.broadcast %cst_67 : f32 to vector<1x256xf32>
    %293 = arith.maximumf %291, %292 : vector<1x256xf32>
    %c3_68 = arith.constant 3 : index
    %294 = memref.load %arg9[%c3_68] : memref<16xf32, #tpu.memory_space<smem>>
    %295 = vector.broadcast %294 : f32 to vector<1x256xf32>
    %296 = arith.mulf %4, %295 : vector<1x256xf32>
    %c3_69 = arith.constant 3 : index
    %297 = memref.load %arg10[%c3_69] : memref<16xf32, #tpu.memory_space<smem>>
    %298 = vector.broadcast %297 : f32 to vector<1x256xf32>
    %299 = arith.mulf %182, %298 : vector<1x256xf32>
    %300 = arith.addf %296, %299 : vector<1x256xf32>
    %c3_70 = arith.constant 3 : index
    %301 = memref.load %arg11[%c3_70] : memref<4xf32, #tpu.memory_space<smem>>
    %302 = vector.broadcast %301 : f32 to vector<1x256xf32>
    %303 = arith.addf %300, %302 : vector<1x256xf32>
    %c7_71 = arith.constant 7 : index
    %304 = memref.load %arg9[%c7_71] : memref<16xf32, #tpu.memory_space<smem>>
    %305 = vector.broadcast %304 : f32 to vector<1x256xf32>
    %306 = arith.mulf %5, %305 : vector<1x256xf32>
    %307 = arith.addf %303, %306 : vector<1x256xf32>
    %c7_72 = arith.constant 7 : index
    %308 = memref.load %arg10[%c7_72] : memref<16xf32, #tpu.memory_space<smem>>
    %309 = vector.broadcast %308 : f32 to vector<1x256xf32>
    %310 = arith.mulf %183, %309 : vector<1x256xf32>
    %311 = arith.addf %307, %310 : vector<1x256xf32>
    %c11_73 = arith.constant 11 : index
    %312 = memref.load %arg9[%c11_73] : memref<16xf32, #tpu.memory_space<smem>>
    %313 = vector.broadcast %312 : f32 to vector<1x256xf32>
    %314 = arith.mulf %6, %313 : vector<1x256xf32>
    %315 = arith.addf %311, %314 : vector<1x256xf32>
    %c11_74 = arith.constant 11 : index
    %316 = memref.load %arg10[%c11_74] : memref<16xf32, #tpu.memory_space<smem>>
    %317 = vector.broadcast %316 : f32 to vector<1x256xf32>
    %318 = arith.mulf %184, %317 : vector<1x256xf32>
    %319 = arith.addf %315, %318 : vector<1x256xf32>
    %c15_75 = arith.constant 15 : index
    %320 = memref.load %arg9[%c15_75] : memref<16xf32, #tpu.memory_space<smem>>
    %321 = vector.broadcast %320 : f32 to vector<1x256xf32>
    %322 = arith.mulf %7, %321 : vector<1x256xf32>
    %323 = arith.addf %319, %322 : vector<1x256xf32>
    %c15_76 = arith.constant 15 : index
    %324 = memref.load %arg10[%c15_76] : memref<16xf32, #tpu.memory_space<smem>>
    %325 = vector.broadcast %324 : f32 to vector<1x256xf32>
    %326 = arith.mulf %185, %325 : vector<1x256xf32>
    %327 = arith.addf %323, %326 : vector<1x256xf32>
    %cst_77 = arith.constant 0.000000e+00 : f32
    %328 = vector.broadcast %cst_77 : f32 to vector<1x256xf32>
    %329 = arith.maximumf %327, %328 : vector<1x256xf32>
    %330 = tpu.concatenate %221, %257, %293, %329 in 0 : vector<1x256xf32>, vector<1x256xf32>, vector<1x256xf32>, vector<1x256xf32> -> vector<4x256xf32>
    %c0_78 = arith.constant 0 : index
    %c0_79 = arith.constant 0 : index
    %c0_80 = arith.constant 0 : index
    %331 = vector.load %arg12[%c0_78, %c0_79, %c0_80] : memref<1x4x256xf32, #tpu.memory_space<vmem>>, vector<1x4x256xf32>
    %332 = vector.shape_cast %331 : vector<1x4x256xf32> to vector<4x256xf32>
    %333 = vector.shape_cast %330 : vector<4x256xf32> to vector<1x4x256xf32>
    tpu.vector_store %arg12[%c0_78, %c0_79, %c0_80], %333 {strides = array<i32>} : memref<1x4x256xf32, #tpu.memory_space<vmem>>, vector<1x4x256xf32>,
    return
  }
  func.func @transform_0(%arg0: i32, %arg1: i32) -> (i32, i32, i32) {
    %c0_i32 = arith.constant 0 : i32
    %c0_i32_0 = arith.constant 0 : i32
    return %arg0, %c0_i32, %arg1 : i32, i32, i32
  }
  func.func @transform_1(%arg0: i32, %arg1: i32) -> (i32, i32, i32) {
    %c0_i32 = arith.constant 0 : i32
    %c0_i32_0 = arith.constant 0 : i32
    return %arg0, %c0_i32, %arg1 : i32, i32, i32
  }
  func.func @transform_2(%arg0: i32, %arg1: i32) -> i32 {
    %c0_i32 = arith.constant 0 : i32
    %c0_i32_0 = arith.constant 0 : i32
    return %c0_i32 : i32
  }
  func.func @transform_3(%arg0: i32, %arg1: i32) -> i32 {
    %c0_i32 = arith.constant 0 : i32
    %c0_i32_0 = arith.constant 0 : i32
    return %c0_i32 : i32
  }
  func.func @transform_4(%arg0: i32, %arg1: i32) -> i32 {
    %c0_i32 = arith.constant 0 : i32
    %c0_i32_0 = arith.constant 0 : i32
    return %c0_i32 : i32
  }
  func.func @transform_5(%arg0: i32, %arg1: i32) -> i32 {
    %c0_i32 = arith.constant 0 : i32
    %c0_i32_0 = arith.constant 0 : i32
    return %c0_i32 : i32
  }
  func.func @transform_6(%arg0: i32, %arg1: i32) -> i32 {
    %c0_i32 = arith.constant 0 : i32
    %c0_i32_0 = arith.constant 0 : i32
    return %c0_i32 : i32
  }
  func.func @transform_7(%arg0: i32, %arg1: i32) -> i32 {
    %c0_i32 = arith.constant 0 : i32
    %c0_i32_0 = arith.constant 0 : i32
    return %c0_i32 : i32
  }
  func.func @transform_8(%arg0: i32, %arg1: i32) -> i32 {
    %c0_i32 = arith.constant 0 : i32
    %c0_i32_0 = arith.constant 0 : i32
    return %c0_i32 : i32
  }
  func.func @transform_9(%arg0: i32, %arg1: i32) -> i32 {
    %c0_i32 = arith.constant 0 : i32
    %c0_i32_0 = arith.constant 0 : i32
    return %c0_i32 : i32
  }
  func.func @transform_10(%arg0: i32, %arg1: i32) -> (i32, i32, i32) {
    %c0_i32 = arith.constant 0 : i32
    %c0_i32_0 = arith.constant 0 : i32
    return %arg0, %c0_i32, %arg1 : i32, i32, i32
  }
  func.func @transform_11(%arg0: i32, %arg1: i32) -> (i32, i32, i32) {
    %c0_i32 = arith.constant 0 : i32
    %c0_i32_0 = arith.constant 0 : i32
    return %arg0, %c0_i32, %arg1 : i32, i32, i32
  }
}

</mosaic_0001>

<llo_original>
// kernel: tpu_custom_call.1
$region0: #{tpu_custom_call.1}
  #allocation0 [shape = 'u32[]', space=smem, size = 0x4, offset = 0x4, fixed_abs, tag = 'smem constant byte address 0x4 - core index']
  #allocation1 [shape = 'u32[72,128]{1,0:T(1,128)}', space=vmem, size = 0x9000, scoped, tag = 'internal scratch']
  #allocation2 [shape = 'f32[1]{0:T(128)S(6)}', space=smem, size = 0x200, scoped, tag = 'scoped memory for tpu_custom_call.1']
  %s0 = inlined_call_operand.hbm [shape: f32[2,4,256], index: 0, kind: input, shape index: {}]
  %s1 = inlined_call_operand.hbm [shape: f32[2,4,256], index: 1, kind: input, shape index: {}]
  %s2 = inlined_call_operand.vmem [shape: f32[16], index: 2, kind: input, shape index: {}]
  %s3 = inlined_call_operand.vmem [shape: f32[4], index: 3, kind: input, shape index: {}]
  %s4 = inlined_call_operand.vmem [shape: f32[16], index: 4, kind: input, shape index: {}]
  %s5 = inlined_call_operand.vmem [shape: f32[4], index: 5, kind: input, shape index: {}]
  %s6 = inlined_call_operand.<no memory space> [shape: f32[1], index: 6, kind: input, shape index: {}]
  %s7 = inlined_call_operand.vmem [shape: f32[16], index: 7, kind: input, shape index: {}]
  %s8 = inlined_call_operand.vmem [shape: f32[16], index: 8, kind: input, shape index: {}]
  %s9 = inlined_call_operand.vmem [shape: f32[4], index: 9, kind: input, shape index: {}]
  %s10 = inlined_call_operand.hbm [shape: f32[2,4,256], index: 10, kind: output, shape index: {0}]
  %s11 = inlined_call_operand.hbm [shape: f32[2,1,256], index: 11, kind: output, shape index: {1}]
  %12 = xla_tuple %s10, %s11
  %s13 = sld [smem:[#allocation0]]
  $region117: #{tpu_custom_call.1} parent=0
    _
  %s15 = ssub.s32 1, %s13
  %s16 = scalar_select 0, %s15, %s13
  %17 = sst [smem:[#allocation2]] %s6
  $region1: #{tpu_custom_call.1} parent=0
    #allocation3 [shape = 'u8[8192]{0}', space=vmem, size = 0x2000, scoped, tag = 'input window, operand 0']
    #allocation4 [shape = 's32[2]{0}', space=sflag, size = 0x8, scoped, tag = 'scoped memory for tpu_custom_call.1']
    #allocation5 [shape = 's32[2]{0}', space=sflag, size = 0x8, scoped, tag = 'scoped memory for tpu_custom_call.1']
    #allocation6 [shape = 's32[2]{0}', space=sflag, size = 0x8, scoped, tag = 'scoped memory for tpu_custom_call.1']
    #allocation7 [shape = 'u8[8192]{0}', space=vmem, size = 0x2000, scoped, tag = 'input window, operand 1']
    #allocation8 [shape = 's32[2]{0}', space=sflag, size = 0x8, scoped, tag = 'scoped memory for tpu_custom_call.1']
    #allocation9 [shape = 'u8[512]{0}', space=smem, size = 0x200, scoped, tag = 'input window, operand 2, single buffered']
    #allocation10 [shape = 'u8[512]{0}', space=smem, size = 0x200, scoped, tag = 'input window, operand 3, single buffered']
    #allocation11 [shape = 's32[1]{0}', space=sflag, size = 0x4, scoped, tag = 'scoped memory for tpu_custom_call.1']
    #allocation12 [shape = 'u8[512]{0}', space=smem, size = 0x200, scoped, tag = 'input window, operand 4, single buffered']
    #allocation13 [shape = 'u8[512]{0}', space=smem, size = 0x200, scoped, tag = 'input window, operand 5, single buffered']
    #allocation14 [shape = 's32[1]{0}', space=sflag, size = 0x4, scoped, tag = 'scoped memory for tpu_custom_call.1']
    #allocation15 [shape = 'u8[512]{0}', space=smem, size = 0x200, scoped, tag = 'input window, operand 7, single buffered']
    #allocation16 [shape = 'u8[512]{0}', space=smem, size = 0x200, scoped, tag = 'input window, operand 8, single buffered']
    #allocation17 [shape = 's32[1]{0}', space=sflag, size = 0x4, scoped, tag = 'scoped memory for tpu_custom_call.1']
    #allocation18 [shape = 'u8[512]{0}', space=smem, size = 0x200, scoped, tag = 'input window, operand 9, single buffered']
    #allocation19 [shape = 'u8[8192]{0}', space=vmem, size = 0x2000, scoped, tag = 'output window, operand 0']
    #allocation20 [shape = 'u8[2048]{0}', space=vmem, size = 0x800, scoped, tag = 'output window, operand 1']
    #allocation21 [shape = 's32[2]{0}', space=sflag, size = 0x8, scoped, tag = 'scoped memory for tpu_custom_call.1']
    %18 = vsyncpa [#allocation4], 0
    %s19 = scalar_lea.sflag [#allocation4], 1
    %20 = vsyncpa %s19, 0
    %21 = vsyncpa [#allocation8], 0
    %s22 = scalar_lea.sflag [#allocation8], 1
    %23 = vsyncpa %s22, 0
    %24 = vsyncpa [#allocation6], 0
    %25 = vsyncpa [#allocation11], 0
    %26 = vsyncpa [#allocation14], 0
    %27 = vsyncpa [#allocation17], 0
    %28 = vsyncpa [#allocation5], 0
    %s29 = scalar_lea.sflag [#allocation5], 1
    %30 = vsyncpa %s29, 0
    %31 = vsyncpa [#allocation21], 0
    %s32 = scalar_lea.sflag [#allocation21], 1
    %33 = vsyncpa %s32, 0
    loop: start=0, step=1, limit=4
    $region2: #{tpu_custom_call.1} parent=1 // loop_pre_header
      _
    $region3: #{tpu_custom_call.1} parent=1 // loop_header
      %s35 = sphi 0, %s39
      %p36 = scmp.ge.s32.totalorder %s35, 4
      %s42 = sphi 0, %s54
      %s43 = sphi 0, %s50
      %s44 = sphi 0, %s42
      %s45 = sphi 0, %s43
      %s46 = sphi 0, %s44
      %s47 = sphi 0, %s45
      %s59 = sphi 0, %s61
      %s62 = sphi 0, %s59
      %s63 = sphi 0, %s62
      %s79 = sphi 0, %s63
      %s87 = sphi 0, %s89
      %s90 = sphi 0, %s87
      %s91 = sphi 0, %s90
      %s107 = sphi 0, %s91
      %s111 = sphi 0, %s111
      %s113 = sphi 0, %s111
      %s114 = sphi 0, %s113
      %s128 = sphi 0, %s114
      %s132 = sphi 0, %s132
      %s134 = sphi 0, %s132
      %s135 = sphi 0, %s134
      %s149 = sphi 0, %s135
      %s153 = sphi 0, %s153
      %s155 = sphi 0, %s153
      %s156 = sphi 0, %s155
      %s170 = sphi 0, %s156
      %s174 = sphi 0, %s174
      %s176 = sphi 0, %s174
      %s177 = sphi 0, %s176
      %s191 = sphi 0, %s177
      %s195 = sphi 0, %s195
      %s197 = sphi 0, %s195
      %s198 = sphi 0, %s197
      %s212 = sphi 0, %s198
      %s216 = sphi 0, %s216
      %s218 = sphi 0, %s216
      %s219 = sphi 0, %s218
      %s233 = sphi 0, %s219
      %s237 = sphi 0, %s237
      %s239 = sphi 0, %s237
      %s240 = sphi 0, %s239
      %s254 = sphi 0, %s240
      %s258 = sphi 0, %s258
      %s260 = sphi 0, %s258
      %s261 = sphi 0, %s260
      %s275 = sphi 0, %s261
      %s283 = sphi 0, %s285
      %s286 = sphi 0, %s283
      %s287 = sphi 0, %s286
      %s303 = sphi 0, %s287
      %s311 = sphi 0, %s313
      %s314 = sphi 0, %s311
      %s315 = sphi 0, %s314
      %s331 = sphi 0, %s315
    $region4: #{tpu_custom_call.1} parent=1 // loop_header_branch
      %38 = sbr.rel (%p36) target = $region8
    $region5: #{tpu_custom_call.1} parent=1 // loop_body
      %s40 = ssub.s32 %s35, 1
      %s41 = ssub.s32 %s35, 2
      %s48 = sadd.s32 1, %s43
      %p49 = scmp.ge.s32.totalorder %s48, 1
      %s50 = scalar_select %p49, 0, %s48
      %s51 = sadd.s32 1, %s42
      %s52 = scalar_select %p49, %s51, %s42
      %p53 = scmp.ge.s32.totalorder %s52, 2
      %s54 = scalar_select %p53, 0, %s52
      %s55 = ssub.s32 %s42, %s54
      %s56 = ssub.s32 %s43, %s50
      %s57 = sor.u32 %s55, %s56
      %p58 = scmp.eq.s32.totalorder %s57, 0
      %s60 = sadd.s32 %s59, 1
      %s61 = scalar_select %p58, %s59, %s60
      %p64 = pneg %p58
      %p65 = scmp.eq.s32.totalorder %s35, 1
      %p66 = por %p64, %p65
      %p67 = scmp.ne.s32.totalorder %s59, %s62
      %p68 = scmp.eq.s32.totalorder %s35, 0
      %p69 = por %p67, %p68
      %p70 = scmp.ne.s32.totalorder %s59, %s62
      %p71 = scmp.eq.s32.totalorder %s40, 1
      %p72 = por %p70, %p71
      %p73 = scmp.ne.s32.totalorder %s62, %s63
      %p74 = scmp.eq.s32.totalorder %s40, 0
      %p75 = por %p73, %p74
      %p76 = scmp.ne.s32.totalorder %s62, %s63
      %p77 = scmp.eq.s32.totalorder %s41, 1
      %p78 = por %p76, %p77
      %p80 = scmp.ne.s32.totalorder %s63, %s79
      %p81 = scmp.eq.s32.totalorder %s41, 0
      %p82 = por %p80, %p81
      %s83 = ssub.s32 %s42, %s54
      %s84 = ssub.s32 %s43, %s50
      %s85 = sor.u32 %s83, %s84
      %p86 = scmp.eq.s32.totalorder %s85, 0
      %s88 = sadd.s32 %s87, 1
      %s89 = scalar_select %p86, %s87, %s88
      %p92 = pneg %p86
      %p93 = scmp.eq.s32.totalorder %s35, 1
      %p94 = por %p92, %p93
      %p95 = scmp.ne.s32.totalorder %s87, %s90
      %p96 = scmp.eq.s32.totalorder %s35, 0
      %p97 = por %p95, %p96
      %p98 = scmp.ne.s32.totalorder %s87, %s90
      %p99 = scmp.eq.s32.totalorder %s40, 1
      %p100 = por %p98, %p99
      %p101 = scmp.ne.s32.totalorder %s90, %s91
      %p102 = scmp.eq.s32.totalorder %s40, 0
      %p103 = por %p101, %p102
      %p104 = scmp.ne.s32.totalorder %s90, %s91
      %p105 = scmp.eq.s32.totalorder %s41, 1
      %p106 = por %p104, %p105
      %p108 = scmp.ne.s32.totalorder %s91, %s107
      %p109 = scmp.eq.s32.totalorder %s41, 0
      %p110 = por %p108, %p109
      %s112 = sadd.s32 %s111, 1
      %p115 = scmp.eq.s32.totalorder %s35, 1
      %p116 = scmp.ne.s32.totalorder %s111, %s113
      %p117 = scmp.eq.s32.totalorder %s35, 0
      %p118 = por %p116, %p117
      %p119 = scmp.ne.s32.totalorder %s111, %s113
      %p120 = scmp.eq.s32.totalorder %s40, 1
      %p121 = por %p119, %p120
      %p122 = scmp.ne.s32.totalorder %s113, %s114
      %p123 = scmp.eq.s32.totalorder %s40, 0
      %p124 = por %p122, %p123
      %p125 = scmp.ne.s32.totalorder %s113, %s114
      %p126 = scmp.eq.s32.totalorder %s41, 1
      %p127 = por %p125, %p126
      %p129 = scmp.ne.s32.totalorder %s114, %s128
      %p130 = scmp.eq.s32.totalorder %s41, 0
      %p131 = por %p129, %p130
      %s133 = sadd.s32 %s132, 1
      %p136 = scmp.eq.s32.totalorder %s35, 1
      %p137 = scmp.ne.s32.totalorder %s132, %s134
      %p138 = scmp.eq.s32.totalorder %s35, 0
      %p139 = por %p137, %p138
      %p140 = scmp.ne.s32.totalorder %s132, %s134
      %p141 = scmp.eq.s32.totalorder %s40, 1
      %p142 = por %p140, %p141
      %p143 = scmp.ne.s32.totalorder %s134, %s135
      %p144 = scmp.eq.s32.totalorder %s40, 0
      %p145 = por %p143, %p144
      %p146 = scmp.ne.s32.totalorder %s134, %s135
      %p147 = scmp.eq.s32.totalorder %s41, 1
      %p148 = por %p146, %p147
      %p150 = scmp.ne.s32.totalorder %s135, %s149
      %p151 = scmp.eq.s32.totalorder %s41, 0
      %p152 = por %p150, %p151
      %s154 = sadd.s32 %s153, 1
      %p157 = scmp.eq.s32.totalorder %s35, 1
      %p158 = scmp.ne.s32.totalorder %s153, %s155
      %p159 = scmp.eq.s32.totalorder %s35, 0
      %p160 = por %p158, %p159
      %p161 = scmp.ne.s32.totalorder %s153, %s155
      %p162 = scmp.eq.s32.totalorder %s40, 1
      %p163 = por %p161, %p162
      %p164 = scmp.ne.s32.totalorder %s155, %s156
      %p165 = scmp.eq.s32.totalorder %s40, 0
      %p166 = por %p164, %p165
      %p167 = scmp.ne.s32.totalorder %s155, %s156
      %p168 = scmp.eq.s32.totalorder %s41, 1
      %p169 = por %p167, %p168
      %p171 = scmp.ne.s32.totalorder %s156, %s170
      %p172 = scmp.eq.s32.totalorder %s41, 0
      %p173 = por %p171, %p172
      %s175 = sadd.s32 %s174, 1
      %p178 = scmp.eq.s32.totalorder %s35, 1
      %p179 = scmp.ne.s32.totalorder %s174, %s176
      %p180 = scmp.eq.s32.totalorder %s35, 0
      %p181 = por %p179, %p180
      %p182 = scmp.ne.s32.totalorder %s174, %s176
      %p183 = scmp.eq.s32.totalorder %s40, 1
      %p184 = por %p182, %p183
      %p185 = scmp.ne.s32.totalorder %s176, %s177
      %p186 = scmp.eq.s32.totalorder %s40, 0
      %p187 = por %p185, %p186
      %p188 = scmp.ne.s32.totalorder %s176, %s177
      %p189 = scmp.eq.s32.totalorder %s41, 1
      %p190 = por %p188, %p189
      %p192 = scmp.ne.s32.totalorder %s177, %s191
      %p193 = scmp.eq.s32.totalorder %s41, 0
      %p194 = por %p192, %p193
      %s196 = sadd.s32 %s195, 1
      %p199 = scmp.eq.s32.totalorder %s35, 1
      %p200 = scmp.ne.s32.totalorder %s195, %s197
      %p201 = scmp.eq.s32.totalorder %s35, 0
      %p202 = por %p200, %p201
      %p203 = scmp.ne.s32.totalorder %s195, %s197
      %p204 = scmp.eq.s32.totalorder %s40, 1
      %p205 = por %p203, %p204
      %p206 = scmp.ne.s32.totalorder %s197, %s198
      %p207 = scmp.eq.s32.totalorder %s40, 0
      %p208 = por %p206, %p207
      %p209 = scmp.ne.s32.totalorder %s197, %s198
      %p210 = scmp.eq.s32.totalorder %s41, 1
      %p211 = por %p209, %p210
      %p213 = scmp.ne.s32.totalorder %s198, %s212
      %p214 = scmp.eq.s32.totalorder %s41, 0
      %p215 = por %p213, %p214
      %s217 = sadd.s32 %s216, 1
      %p220 = scmp.eq.s32.totalorder %s35, 1
      %p221 = scmp.ne.s32.totalorder %s216, %s218
      %p222 = scmp.eq.s32.totalorder %s35, 0
      %p223 = por %p221, %p222
      %p224 = scmp.ne.s32.totalorder %s216, %s218
      %p225 = scmp.eq.s32.totalorder %s40, 1
      %p226 = por %p224, %p225
      %p227 = scmp.ne.s32.totalorder %s218, %s219
      %p228 = scmp.eq.s32.totalorder %s40, 0
      %p229 = por %p227, %p228
      %p230 = scmp.ne.s32.totalorder %s218, %s219
      %p231 = scmp.eq.s32.totalorder %s41, 1
      %p232 = por %p230, %p231
      %p234 = scmp.ne.s32.totalorder %s219, %s233
      %p235 = scmp.eq.s32.totalorder %s41, 0
      %p236 = por %p234, %p235
      %s238 = sadd.s32 %s237, 1
      %p241 = scmp.eq.s32.totalorder %s35, 1
      %p242 = scmp.ne.s32.totalorder %s237, %s239
      %p243 = scmp.eq.s32.totalorder %s35, 0
      %p244 = por %p242, %p243
      %p245 = scmp.ne.s32.totalorder %s237, %s239
      %p246 = scmp.eq.s32.totalorder %s40, 1
      %p247 = por %p245, %p246
      %p248 = scmp.ne.s32.totalorder %s239, %s240
      %p249 = scmp.eq.s32.totalorder %s40, 0
      %p250 = por %p248, %p249
      %p251 = scmp.ne.s32.totalorder %s239, %s240
      %p252 = scmp.eq.s32.totalorder %s41, 1
      %p253 = por %p251, %p252
      %p255 = scmp.ne.s32.totalorder %s240, %s254
      %p256 = scmp.eq.s32.totalorder %s41, 0
      %p257 = por %p255, %p256
      %s259 = sadd.s32 %s258, 1
      %p262 = scmp.eq.s32.totalorder %s35, 1
      %p263 = scmp.ne.s32.totalorder %s258, %s260
      %p264 = scmp.eq.s32.totalorder %s35, 0
      %p265 = por %p263, %p264
      %p266 = scmp.ne.s32.totalorder %s258, %s260
      %p267 = scmp.eq.s32.totalorder %s40, 1
      %p268 = por %p266, %p267
      %p269 = scmp.ne.s32.totalorder %s260, %s261
      %p270 = scmp.eq.s32.totalorder %s40, 0
      %p271 = por %p269, %p270
      %p272 = scmp.ne.s32.totalorder %s260, %s261
      %p273 = scmp.eq.s32.totalorder %s41, 1
      %p274 = por %p272, %p273
      %p276 = scmp.ne.s32.totalorder %s261, %s275
      %p277 = scmp.eq.s32.totalorder %s41, 0
      %p278 = por %p276, %p277
      %s279 = ssub.s32 %s42, %s54
      %s280 = ssub.s32 %s43, %s50
      %s281 = sor.u32 %s279, %s280
      %p282 = scmp.eq.s32.totalorder %s281, 0
      %s284 = sadd.s32 %s283, 1
      %s285 = scalar_select %p282, %s283, %s284
      %p288 = pneg %p282
      %p289 = scmp.eq.s32.totalorder %s35, 1
      %p290 = por %p288, %p289
      %p291 = scmp.ne.s32.totalorder %s283, %s286
      %p292 = scmp.eq.s32.totalorder %s35, 0
      %p293 = por %p291, %p292
      %p294 = scmp.ne.s32.totalorder %s283, %s286
      %p295 = scmp.eq.s32.totalorder %s40, 1
      %p296 = por %p294, %p295
      %p297 = scmp.ne.s32.totalorder %s286, %s287
      %p298 = scmp.eq.s32.totalorder %s40, 0
      %p299 = por %p297, %p298
      %p300 = scmp.ne.s32.totalorder %s286, %s287
      %p301 = scmp.eq.s32.totalorder %s41, 1
      %p302 = por %p300, %p301
      %p304 = scmp.ne.s32.totalorder %s287, %s303
      %p305 = scmp.eq.s32.totalorder %s41, 0
      %p306 = por %p304, %p305
      %s307 = ssub.s32 %s42, %s54
      %s308 = ssub.s32 %s43, %s50
      %s309 = sor.u32 %s307, %s308
      %p310 = scmp.eq.s32.totalorder %s309, 0
      %s312 = sadd.s32 %s311, 1
      %s313 = scalar_select %p310, %s311, %s312
      %p316 = pneg %p310
      %p317 = scmp.eq.s32.totalorder %s35, 1
      %p318 = por %p316, %p317
      %p319 = scmp.ne.s32.totalorder %s311, %s314
      %p320 = scmp.eq.s32.totalorder %s35, 0
      %p321 = por %p319, %p320
      %p322 = scmp.ne.s32.totalorder %s311, %s314
      %p323 = scmp.eq.s32.totalorder %s40, 1
      %p324 = por %p322, %p323
      %p325 = scmp.ne.s32.totalorder %s314, %s315
      %p326 = scmp.eq.s32.totalorder %s40, 0
      %p327 = por %p325, %p326
      %p328 = scmp.ne.s32.totalorder %s314, %s315
      %p329 = scmp.eq.s32.totalorder %s41, 1
      %p330 = por %p328, %p329
      %p332 = scmp.ne.s32.totalorder %s315, %s331
      %p333 = scmp.eq.s32.totalorder %s41, 0
      %p334 = por %p332, %p333
      %p335 = scmp.le.s32.totalorder 1, %s35
      %p336 = scmp.lt.s32.totalorder %s35, 3
      %p337 = pnand %p335, %p336
      %p338 = pneg %p337
      // Predicated region
      $region9: #{tpu_custom_call.1} parent=5 // pred_check
        _
      $region10: #{tpu_custom_call.1} parent=5 // pred_check_branch
        %340 = sbr.rel (%p337) target = $region12
      $region11: #{tpu_custom_call.1} parent=5 // pred_region
        %s341 = ssub.s32 %s35, 1
        // Predicated region
        $region13: #{tpu_custom_call.1} parent=11 // pred_check
          %p342 = pneg %p124
        $region14: #{tpu_custom_call.1} parent=11 // pred_check_branch
          %344 = sbr.rel (%p342) target = $region16
        $region15: #{tpu_custom_call.1} parent=11 // pred_region
          %346 = vsyncadd [#allocation6], 0
          %s348 = sshll.u32 %s2, 4
          %s349 = int_to_ptr.vmem [resolvable:$true] %s348
          %351 = dma.vmem_to_smem %s349, 16, [#allocation9], [#allocation6]
        $region16: #{tpu_custom_call.1} parent=11 // pred_fallthru
          _
        // Predicated region
        $region17: #{tpu_custom_call.1} parent=11 // pred_check
          %p352 = pneg %p145
        $region18: #{tpu_custom_call.1} parent=11 // pred_check_branch
          %354 = sbr.rel (%p352) target = $region20
        $region19: #{tpu_custom_call.1} parent=11 // pred_region
          %356 = vsyncadd [#allocation11], 0
          %s358 = sshll.u32 %s3, 4
          %s359 = int_to_ptr.vmem [resolvable:$true] %s358
          %361 = dma.vmem_to_smem %s359, 16, [#allocation10], [#allocation11]
        $region20: #{tpu_custom_call.1} parent=11 // pred_fallthru
          _
        // Predicated region
        $region21: #{tpu_custom_call.1} parent=11 // pred_check
          %p362 = pneg %p166
        $region22: #{tpu_custom_call.1} parent=11 // pred_check_branch
          %364 = sbr.rel (%p362) target = $region24
        $region23: #{tpu_custom_call.1} parent=11 // pred_region
          %366 = vsyncadd [#allocation11], 0
          %s368 = sshll.u32 %s4, 4
          %s369 = int_to_ptr.vmem [resolvable:$true] %s368
          %371 = dma.vmem_to_smem %s369, 16, [#allocation12], [#allocation11]
        $region24: #{tpu_custom_call.1} parent=11 // pred_fallthru
          _
        // Predicated region
        $region25: #{tpu_custom_call.1} parent=11 // pred_check
          %p372 = pneg %p187
        $region26: #{tpu_custom_call.1} parent=11 // pred_check_branch
          %374 = sbr.rel (%p372) target = $region28
        $region27: #{tpu_custom_call.1} parent=11 // pred_region
          %376 = vsyncadd [#allocation14], 0
          %s378 = sshll.u32 %s5, 4
          %s379 = int_to_ptr.vmem [resolvable:$true] %s378
          %381 = dma.vmem_to_smem %s379, 16, [#allocation13], [#allocation14]
        $region28: #{tpu_custom_call.1} parent=11 // pred_fallthru
          _
        // Predicated region
        $region29: #{tpu_custom_call.1} parent=11 // pred_check
          %p382 = pneg %p208
        $region30: #{tpu_custom_call.1} parent=11 // pred_check_branch
          %384 = sbr.rel (%p382) target = $region32
        $region31: #{tpu_custom_call.1} parent=11 // pred_region
          _
        $region32: #{tpu_custom_call.1} parent=11 // pred_fallthru
          _
        // Predicated region
        $region33: #{tpu_custom_call.1} parent=11 // pred_check
          %p385 = pneg %p229
        $region34: #{tpu_custom_call.1} parent=11 // pred_check_branch
          %387 = sbr.rel (%p385) target = $region36
        $region35: #{tpu_custom_call.1} parent=11 // pred_region
          %389 = vsyncadd [#allocation14], 0
          %s391 = sshll.u32 %s7, 4
          %s392 = int_to_ptr.vmem [resolvable:$true] %s391
          %394 = dma.vmem_to_smem %s392, 16, [#allocation15], [#allocation14]
        $region36: #{tpu_custom_call.1} parent=11 // pred_fallthru
          _
        // Predicated region
        $region37: #{tpu_custom_call.1} parent=11 // pred_check
          %p395 = pneg %p250
        $region38: #{tpu_custom_call.1} parent=11 // pred_check_branch
          %397 = sbr.rel (%p395) target = $region40
        $region39: #{tpu_custom_call.1} parent=11 // pred_region
          %399 = vsyncadd [#allocation17], 0
          %s401 = sshll.u32 %s8, 4
          %s402 = int_to_ptr.vmem [resolvable:$true] %s401
          %404 = dma.vmem_to_smem %s402, 16, [#allocation16], [#allocation17]
        $region40: #{tpu_custom_call.1} parent=11 // pred_fallthru
          _
        // Predicated region
        $region41: #{tpu_custom_call.1} parent=11 // pred_check
          %p405 = pneg %p271
        $region42: #{tpu_custom_call.1} parent=11 // pred_check_branch
          %407 = sbr.rel (%p405) target = $region44
        $region43: #{tpu_custom_call.1} parent=11 // pred_region
          %409 = vsyncadd [#allocation17], 0
          %s411 = sshll.u32 %s9, 4
          %s412 = int_to_ptr.vmem [resolvable:$true] %s411
          %414 = dma.vmem_to_smem %s412, 16, [#allocation18], [#allocation17]
        $region44: #{tpu_custom_call.1} parent=11 // pred_fallthru
          _
      $region12: #{tpu_custom_call.1} parent=5 // pred_fallthru
        _
      %p415 = scmp.lt.s32.totalorder %s35, 2
      // Predicated region
      $region45: #{tpu_custom_call.1} parent=5 // pred_check
        %p416 = pneg %p415
      $region46: #{tpu_custom_call.1} parent=5 // pred_check_branch
        %418 = sbr.rel (%p416) target = $region48
      $region47: #{tpu_custom_call.1} parent=5 // pred_region
        // Predicated region
        $region49: #{tpu_custom_call.1} parent=47 // pred_check
          %p419 = pneg %p69
        $region50: #{tpu_custom_call.1} parent=47 // pred_check_branch
          %421 = sbr.rel (%p419) target = $region52
        $region51: #{tpu_custom_call.1} parent=47 // pred_region
          %s422 = sand.u32 %s59, 1
          %s423 = scalar_lea.sflag [#allocation4], %s422
          %s424 = sand.u32 %s59, 1
          %s425 = smul.addr %s424, 8
          %s426 = scalar_lea.vmem [#allocation3], %s425
          %s427 = smul.u32 2, %s43
          %429 = vsyncadd %s423, 0
          %s430 = smul.addr %s42, 2
          %s431 = sadd.s32 %s427, %s430
          %s432 = smul.addr %s431, 4
          %s433 = scalar_lea.hbm %s0, %s432
          %s435 = sshll.u32 %s433, 4
          %s436 = int_to_ptr.hbm [resolvable:$true] %s435
          %s437 = sshll.u32 %s426, 4
          %s438 = int_to_ptr.vmem [resolvable:$true] %s437
          %440 = dma.hbm_to_vmem [thread:$0]  %s436, 128, %s438, %s423
        $region52: #{tpu_custom_call.1} parent=47 // pred_fallthru
          _
        // Predicated region
        $region53: #{tpu_custom_call.1} parent=47 // pred_check
          %p441 = pneg %p97
        $region54: #{tpu_custom_call.1} parent=47 // pred_check_branch
          %443 = sbr.rel (%p441) target = $region56
        $region55: #{tpu_custom_call.1} parent=47 // pred_region
          %s444 = sand.u32 %s87, 1
          %s445 = scalar_lea.sflag [#allocation8], %s444
          %s446 = sand.u32 %s87, 1
          %s447 = smul.addr %s446, 8
          %s448 = scalar_lea.vmem [#allocation7], %s447
          %s449 = smul.u32 2, %s43
          %451 = vsyncadd %s445, 0
          %s452 = smul.addr %s42, 2
          %s453 = sadd.s32 %s449, %s452
          %s454 = smul.addr %s453, 4
          %s455 = scalar_lea.hbm %s1, %s454
          %s457 = sshll.u32 %s455, 4
          %s458 = int_to_ptr.hbm [resolvable:$true] %s457
          %s459 = sshll.u32 %s448, 4
          %s460 = int_to_ptr.vmem [resolvable:$true] %s459
          %462 = dma.hbm_to_vmem [thread:$0]  %s458, 128, %s460, %s445
        $region56: #{tpu_custom_call.1} parent=47 // pred_fallthru
          _
      $region48: #{tpu_custom_call.1} parent=5 // pred_fallthru
        _
      %p463 = scmp.le.s32.totalorder 1, %s35
      %p464 = scmp.lt.s32.totalorder %s35, 3
      %p465 = pnand %p463, %p464
      %p466 = pneg %p465
      // Predicated region
      $region57: #{tpu_custom_call.1} parent=5 // pred_check
        _
      $region58: #{tpu_custom_call.1} parent=5 // pred_check_branch
        %468 = sbr.rel (%p465) target = $region60
      $region59: #{tpu_custom_call.1} parent=5 // pred_region
        %s469 = ssub.s32 %s35, 1
        %s470 = sand.u32 %s62, 1
        %s471 = scalar_lea.sflag [#allocation4], %s470
        %s472 = sand.u32 %s62, 1
        %s473 = smul.addr %s472, 8
        %s474 = scalar_lea.vmem [#allocation3], %s473
        // Predicated region
        $region61: #{tpu_custom_call.1} parent=59 // pred_check
          %p475 = pneg %p75
        $region62: #{tpu_custom_call.1} parent=59 // pred_check_branch
          %477 = sbr.rel (%p475) target = $region64
        $region63: #{tpu_custom_call.1} parent=59 // pred_region
          %479 = dma.done %s471, 128
        $region64: #{tpu_custom_call.1} parent=59 // pred_fallthru
          _
        %s480 = sand.u32 %s90, 1
        %s481 = scalar_lea.sflag [#allocation8], %s480
        %s482 = sand.u32 %s90, 1
        %s483 = smul.addr %s482, 8
        %s484 = scalar_lea.vmem [#allocation7], %s483
        // Predicated region
        $region65: #{tpu_custom_call.1} parent=59 // pred_check
          %p485 = pneg %p103
        $region66: #{tpu_custom_call.1} parent=59 // pred_check_branch
          %487 = sbr.rel (%p485) target = $region68
        $region67: #{tpu_custom_call.1} parent=59 // pred_region
          %489 = dma.done %s481, 128
        $region68: #{tpu_custom_call.1} parent=59 // pred_fallthru
          _
        // Predicated region
        $region69: #{tpu_custom_call.1} parent=59 // pred_check
          %p490 = pneg %p124
        $region70: #{tpu_custom_call.1} parent=59 // pred_check_branch
          %492 = sbr.rel (%p490) target = $region72
        $region71: #{tpu_custom_call.1} parent=59 // pred_region
          %494 = dma.done [#allocation6], 16
        $region72: #{tpu_custom_call.1} parent=59 // pred_fallthru
          _
        // Predicated region
        $region73: #{tpu_custom_call.1} parent=59 // pred_check
          %p495 = pneg %p145
        $region74: #{tpu_custom_call.1} parent=59 // pred_check_branch
          %497 = sbr.rel (%p495) target = $region76
        $region75: #{tpu_custom_call.1} parent=59 // pred_region
          %499 = dma.done [#allocation11], 16
        $region76: #{tpu_custom_call.1} parent=59 // pred_fallthru
          _
        // Predicated region
        $region77: #{tpu_custom_call.1} parent=59 // pred_check
          %p500 = pneg %p166
        $region78: #{tpu_custom_call.1} parent=59 // pred_check_branch
          %502 = sbr.rel (%p500) target = $region80
        $region79: #{tpu_custom_call.1} parent=59 // pred_region
          %504 = dma.done [#allocation11], 16
        $region80: #{tpu_custom_call.1} parent=59 // pred_fallthru
          _
        // Predicated region
        $region81: #{tpu_custom_call.1} parent=59 // pred_check
          %p505 = pneg %p187
        $region82: #{tpu_custom_call.1} parent=59 // pred_check_branch
          %507 = sbr.rel (%p505) target = $region84
        $region83: #{tpu_custom_call.1} parent=59 // pred_region
          %509 = dma.done [#allocation14], 16
        $region84: #{tpu_custom_call.1} parent=59 // pred_fallthru
          _
        // Predicated region
        $region85: #{tpu_custom_call.1} parent=59 // pred_check
          %p510 = pneg %p229
        $region86: #{tpu_custom_call.1} parent=59 // pred_check_branch
          %512 = sbr.rel (%p510) target = $region88
        $region87: #{tpu_custom_call.1} parent=59 // pred_region
          %514 = dma.done [#allocation14], 16
        $region88: #{tpu_custom_call.1} parent=59 // pred_fallthru
          _
        // Predicated region
        $region89: #{tpu_custom_call.1} parent=59 // pred_check
          %p515 = pneg %p250
        $region90: #{tpu_custom_call.1} parent=59 // pred_check_branch
          %517 = sbr.rel (%p515) target = $region92
        $region91: #{tpu_custom_call.1} parent=59 // pred_region
          %519 = dma.done [#allocation17], 16
        $region92: #{tpu_custom_call.1} parent=59 // pred_fallthru
          _
        // Predicated region
        $region93: #{tpu_custom_call.1} parent=59 // pred_check
          %p520 = pneg %p271
        $region94: #{tpu_custom_call.1} parent=59 // pred_check_branch
          %522 = sbr.rel (%p520) target = $region96
        $region95: #{tpu_custom_call.1} parent=59 // pred_region
          %524 = dma.done [#allocation17], 16
        $region96: #{tpu_custom_call.1} parent=59 // pred_fallthru
          _
        %525 = sfence
        %s526 = sand.u32 %s62, 1
        %s527 = scalar_lea.sflag [#allocation4], %s526
        %s528 = sand.u32 %s62, 1
        %s529 = smul.addr %s528, 8
        %s530 = scalar_lea.vmem [#allocation3], %s529
        %p531 = pneg %p75
        %p532 = pneg %p72
        %s533 = sand.u32 %s90, 1
        %s534 = scalar_lea.sflag [#allocation8], %s533
        %s535 = sand.u32 %s90, 1
        %s536 = smul.addr %s535, 8
        %s537 = scalar_lea.vmem [#allocation7], %s536
        %p538 = pneg %p103
        %p539 = pneg %p100
        %p540 = pneg %p124
        %p541 = pneg %p121
        %p542 = pneg %p145
        %p543 = pneg %p142
        %p544 = pneg %p166
        %p545 = pneg %p163
        %p546 = pneg %p187
        %p547 = pneg %p184
        %p548 = pneg %p208
        %p549 = pneg %p205
        %p550 = pneg %p229
        %p551 = pneg %p226
        %p552 = pneg %p250
        %p553 = pneg %p247
        %p554 = pneg %p271
        %p555 = pneg %p268
        %p556 = pneg %p299
        %p557 = pneg %p296
        %s558 = sand.u32 %s286, 1
        %s559 = scalar_lea.sflag [#allocation5], %s558
        %s560 = sand.u32 %s286, 1
        %s561 = smul.addr %s560, 8
        %s562 = scalar_lea.vmem [#allocation19], %s561
        %p563 = pneg %p327
        %p564 = pneg %p324
        %s565 = sand.u32 %s314, 1
        %s566 = scalar_lea.sflag [#allocation21], %s565
        %s567 = sand.u32 %s314, 1
        %s568 = smul.addr %s567, 2
        %s569 = scalar_lea.vmem [#allocation20], %s568
        %s570 = smul.u32 2, %s45
        %s571 = smul.u32 2, %s45
        %s572 = smul.u32 2, %s45
        %s573 = smul.u32 2, %s45
        %v574 = vld [vmem:[%s474] sm:$0xff]
        %v575 = vld [vmem:[%s484] sm:$0xff]
        %s576 = sld [smem:[#allocation9]]
        %v577 = vstv %s576
        %v578 = vmul.f32 %v574, %v577
        %s579 = sld [smem:[#allocation12]]
        %v580 = vstv %s579
        %v581 = vmul.f32 %v575, %v580
        %v582 = vadd.f32 %v578, %v581
        %s583 = sld [smem:[#allocation10]]
        %v584 = vstv %s583
        %v585 = vadd.f32 %v582, %v584
        %s586 = sld [smem:[#allocation9 + $0x4]]
        %v587 = vstv %s586
        %v588 = vmul.f32 %v574, %v587
        %v590 = vrot.slane %v588, 5
        %v591 = vrot.slane %v590, 4
        %v593 = vadd.f32 %v585, %v591
        %s594 = sld [smem:[#allocation12 + $0x4]]
        %v595 = vstv %s594
        %v596 = vmul.f32 %v575, %v595
        %v598 = vrot.slane %v596, 5
        %v599 = vrot.slane %v598, 4
        %v601 = vadd.f32 %v593, %v599
        %s602 = sld [smem:[#allocation9 + $0x8]]
        %v603 = vstv %s602
        %v604 = vmul.f32 %v574, %v603
        %v606 = vrot.slane %v604, 6
        %v607 = vrot.slane %v606, 4
        %v609 = vadd.f32 %v601, %v607
        %s610 = sld [smem:[#allocation12 + $0x8]]
        %v611 = vstv %s610
        %v612 = vmul.f32 %v575, %v611
        %v614 = vrot.slane %v612, 6
        %v615 = vrot.slane %v614, 4
        %v617 = vadd.f32 %v609, %v615
        %s618 = sld [smem:[#allocation9 + $0xc]]
        %v619 = vstv %s618
        %v620 = vmul.f32 %v574, %v619
        %v622 = vrot.slane %v620, 7
        %v623 = vrot.slane %v622, 4
        %v625 = vadd.f32 %v617, %v623
        %s626 = sld [smem:[#allocation12 + $0xc]]
        %v627 = vstv %s626
        %v628 = vmul.f32 %v575, %v627
        %v630 = vrot.slane %v628, 7
        %v631 = vrot.slane %v630, 4
        %v633 = vadd.f32 %v625, %v631
        %v634 = vmax.f32 %v633, 0.0
        %s635 = sld [smem:[#allocation9 + $0x1]]
        %v636 = vstv %s635
        %v637 = vmul.f32 %v574, %v636
        %s638 = sld [smem:[#allocation12 + $0x1]]
        %v639 = vstv %s638
        %v640 = vmul.f32 %v575, %v639
        %v641 = vadd.f32 %v637, %v640
        %s642 = sld [smem:[#allocation10 + $0x1]]
        %v643 = vstv %s642
        %v644 = vadd.f32 %v641, %v643
        %s645 = sld [smem:[#allocation9 + $0x5]]
        %v646 = vstv %s645
        %v647 = vmul.f32 %v574, %v646
        %v649 = vrot.slane %v647, 5
        %v650 = vrot.slane %v649, 4
        %v652 = vadd.f32 %v644, %v650
        %s653 = sld [smem:[#allocation12 + $0x5]]
        %v654 = vstv %s653
        %v655 = vmul.f32 %v575, %v654
        %v657 = vrot.slane %v655, 5
        %v658 = vrot.slane %v657, 4
        %v660 = vadd.f32 %v652, %v658
        %s661 = sld [smem:[#allocation9 + $0x9]]
        %v662 = vstv %s661
        %v663 = vmul.f32 %v574, %v662
        %v665 = vrot.slane %v663, 6
        %v666 = vrot.slane %v665, 4
        %v668 = vadd.f32 %v660, %v666
        %s669 = sld [smem:[#allocation12 + $0x9]]
        %v670 = vstv %s669
        %v671 = vmul.f32 %v575, %v670
        %v673 = vrot.slane %v671, 6
        %v674 = vrot.slane %v673, 4
        %v676 = vadd.f32 %v668, %v674
        %s677 = sld [smem:[#allocation9 + $0xd]]
        %v678 = vstv %s677
        %v679 = vmul.f32 %v574, %v678
        %v681 = vrot.slane %v679, 7
        %v682 = vrot.slane %v681, 4
        %v684 = vadd.f32 %v676, %v682
        %s685 = sld [smem:[#allocation12 + $0xd]]
        %v686 = vstv %s685
        %v687 = vmul.f32 %v575, %v686
        %v689 = vrot.slane %v687, 7
        %v690 = vrot.slane %v689, 4
        %v692 = vadd.f32 %v684, %v690
        %v693 = vmax.f32 %v692, 0.0
        %s694 = sld [smem:[#allocation9 + $0x2]]
        %v695 = vstv %s694
        %v696 = vmul.f32 %v574, %v695
        %s697 = sld [smem:[#allocation12 + $0x2]]
        %v698 = vstv %s697
        %v699 = vmul.f32 %v575, %v698
        %v700 = vadd.f32 %v696, %v699
        %s701 = sld [smem:[#allocation10 + $0x2]]
        %v702 = vstv %s701
        %v703 = vadd.f32 %v700, %v702
        %s704 = sld [smem:[#allocation9 + $0x6]]
        %v705 = vstv %s704
        %v706 = vmul.f32 %v574, %v705
        %v708 = vrot.slane %v706, 5
        %v709 = vrot.slane %v708, 4
        %v711 = vadd.f32 %v703, %v709
        %s712 = sld [smem:[#allocation12 + $0x6]]
        %v713 = vstv %s712
        %v714 = vmul.f32 %v575, %v713
        %v716 = vrot.slane %v714, 5
        %v717 = vrot.slane %v716, 4
        %v719 = vadd.f32 %v711, %v717
        %s720 = sld [smem:[#allocation9 + $0xa]]
        %v721 = vstv %s720
        %v722 = vmul.f32 %v574, %v721
        %v724 = vrot.slane %v722, 6
        %v725 = vrot.slane %v724, 4
        %v727 = vadd.f32 %v719, %v725
        %s728 = sld [smem:[#allocation12 + $0xa]]
        %v729 = vstv %s728
        %v730 = vmul.f32 %v575, %v729
        %v732 = vrot.slane %v730, 6
        %v733 = vrot.slane %v732, 4
        %v735 = vadd.f32 %v727, %v733
        %s736 = sld [smem:[#allocation9 + $0xe]]
        %v737 = vstv %s736
        %v738 = vmul.f32 %v574, %v737
        %v740 = vrot.slane %v738, 7
        %v741 = vrot.slane %v740, 4
        %v743 = vadd.f32 %v735, %v741
        %s744 = sld [smem:[#allocation12 + $0xe]]
        %v745 = vstv %s744
        %v746 = vmul.f32 %v575, %v745
        %v748 = vrot.slane %v746, 7
        %v749 = vrot.slane %v748, 4
        %v751 = vadd.f32 %v743, %v749
        %v752 = vmax.f32 %v751, 0.0
        %s753 = sld [smem:[#allocation9 + $0x3]]
        %v754 = vstv %s753
        %v755 = vmul.f32 %v574, %v754
        %s756 = sld [smem:[#allocation12 + $0x3]]
        %v757 = vstv %s756
        %v758 = vmul.f32 %v575, %v757
        %v759 = vadd.f32 %v755, %v758
        %s760 = sld [smem:[#allocation10 + $0x3]]
        %v761 = vstv %s760
        %v762 = vadd.f32 %v759, %v761
        %s763 = sld [smem:[#allocation9 + $0x7]]
        %v764 = vstv %s763
        %v765 = vmul.f32 %v574, %v764
        %v767 = vrot.slane %v765, 5
        %v768 = vrot.slane %v767, 4
        %v770 = vadd.f32 %v762, %v768
        %s771 = sld [smem:[#allocation12 + $0x7]]
        %v772 = vstv %s771
        %v773 = vmul.f32 %v575, %v772
        %v775 = vrot.slane %v773, 5
        %v776 = vrot.slane %v775, 4
        %v778 = vadd.f32 %v770, %v776
        %s779 = sld [smem:[#allocation9 + $0xb]]
        %v780 = vstv %s779
        %v781 = vmul.f32 %v574, %v780
        %v783 = vrot.slane %v781, 6
        %v784 = vrot.slane %v783, 4
        %v786 = vadd.f32 %v778, %v784
        %s787 = sld [smem:[#allocation12 + $0xb]]
        %v788 = vstv %s787
        %v789 = vmul.f32 %v575, %v788
        %v791 = vrot.slane %v789, 6
        %v792 = vrot.slane %v791, 4
        %v794 = vadd.f32 %v786, %v792
        %s795 = sld [smem:[#allocation9 + $0xf]]
        %v796 = vstv %s795
        %v797 = vmul.f32 %v574, %v796
        %v799 = vrot.slane %v797, 7
        %v800 = vrot.slane %v799, 4
        %v802 = vadd.f32 %v794, %v800
        %s803 = sld [smem:[#allocation12 + $0xf]]
        %v804 = vstv %s803
        %v805 = vmul.f32 %v575, %v804
        %v807 = vrot.slane %v805, 7
        %v808 = vrot.slane %v807, 4
        %v810 = vadd.f32 %v802, %v808
        %v811 = vmax.f32 %v810, 0.0
        %s812 = sld [smem:[#allocation13]]
        %v813 = vstv %s812
        %v814 = vmul.f32 %v634, %v813
        %s815 = sld [smem:[#allocation2]]
        %v816 = vstv %s815
        %v817 = vadd.f32 %v814, %v816
        %s818 = sld [smem:[#allocation13 + $0x1]]
        %v819 = vstv %s818
        %v820 = vmul.f32 %v693, %v819
        %v821 = vadd.f32 %v817, %v820
        %s822 = sld [smem:[#allocation13 + $0x2]]
        %v823 = vstv %s822
        %v824 = vmul.f32 %v752, %v823
        %v825 = vadd.f32 %v821, %v824
        %s826 = sld [smem:[#allocation13 + $0x3]]
        %v827 = vstv %s826
        %v828 = vmul.f32 %v811, %v827
        %v829 = vadd.f32 %v825, %v828
        %v830 = vxor.u32 %v829, 2147483648
        %v831 = vmul.f32 %v830, 1.442695
        %v832 = vpow.pop %v831
        %v833 = vadd.f32 %v832, 1.0
        %v834 = vrcp.pop %v833
        %v835 = vmul.f32 %v833, %v834
        %v836 = vsub.f32 1.0, %v835
        %v837 = vmul.f32 %v834, %v836
        %v838 = vadd.f32 %v834, %v837
        %vm839 = vweird.f32 %v833
        %vm840 = vweird.f32 %v834
        %vm841 = vmor %vm839, %vm840
        %v842 = vsel %vm841, %v834, %v838
        %v843 = vand.u32 2147483647, %v833
        %vm844 = vcmp.eq.f32.partialorder %v843, 8.507059e+37
        %v845 = vand.u32 %v833, 2147483648
        %v846 = vor.u32 1.1754944e-38, %v845
        %v847 = vsel %vm844, %v846, %v842
        %v848 = vmul.f32 1.0, %v847
        %v850 = vrot.slane %v848, 3
        %vm851 = vcmask 1040384
        %v852 = vsel %vm851, %v848, %v850
        %v854 = vlaneseq
        %vm855 = vcmp.ge.s32.totalorder %v854, 0
        %vm856 = vcmp.lt.s32.totalorder %v854, 256
        %vm857 = vmand %vm855, %vm856
        %858 = vst.msk [vmem:[%s569] sm:$0x3] %vm857, %v852
        %v859 = vmul.f32 %v575, %v848
        %v860 = vrot.slane %v848, 7
        %v862 = vmul.f32 %v575, %v860
        %v863 = vrot.slane %v848, 6
        %v865 = vmul.f32 %v575, %v863
        %v866 = vrot.slane %v848, 5
        %v868 = vmul.f32 %v575, %v866
        %s869 = sld [smem:[#allocation15]]
        %v870 = vstv %s869
        %v871 = vmul.f32 %v574, %v870
        %s872 = sld [smem:[#allocation16]]
        %v873 = vstv %s872
        %v874 = vmul.f32 %v859, %v873
        %v875 = vadd.f32 %v871, %v874
        %s876 = sld [smem:[#allocation18]]
        %v877 = vstv %s876
        %v878 = vadd.f32 %v875, %v877
        %s879 = sld [smem:[#allocation15 + $0x4]]
        %v880 = vstv %s879
        %v881 = vmul.f32 %v574, %v880
        %v883 = vrot.slane %v881, 5
        %v884 = vrot.slane %v883, 4
        %v886 = vadd.f32 %v878, %v884
        %s887 = sld [smem:[#allocation16 + $0x4]]
        %v888 = vstv %s887
        %v889 = vmul.f32 %v862, %v888
        %v891 = vrot.slane %v889, 5
        %v892 = vrot.slane %v891, 4
        %v894 = vadd.f32 %v886, %v892
        %s895 = sld [smem:[#allocation15 + $0x8]]
        %v896 = vstv %s895
        %v897 = vmul.f32 %v574, %v896
        %v899 = vrot.slane %v897, 6
        %v900 = vrot.slane %v899, 4
        %v902 = vadd.f32 %v894, %v900
        %s903 = sld [smem:[#allocation16 + $0x8]]
        %v904 = vstv %s903
        %v905 = vmul.f32 %v865, %v904
        %v907 = vrot.slane %v905, 6
        %v908 = vrot.slane %v907, 4
        %v910 = vadd.f32 %v902, %v908
        %s911 = sld [smem:[#allocation15 + $0xc]]
        %v912 = vstv %s911
        %v913 = vmul.f32 %v574, %v912
        %v915 = vrot.slane %v913, 7
        %v916 = vrot.slane %v915, 4
        %v918 = vadd.f32 %v910, %v916
        %s919 = sld [smem:[#allocation16 + $0xc]]
        %v920 = vstv %s919
        %v921 = vmul.f32 %v868, %v920
        %v923 = vrot.slane %v921, 7
        %v924 = vrot.slane %v923, 4
        %v926 = vadd.f32 %v918, %v924
        %v927 = vmax.f32 %v926, 0.0
        %s928 = sld [smem:[#allocation15 + $0x1]]
        %v929 = vstv %s928
        %v930 = vmul.f32 %v574, %v929
        %s931 = sld [smem:[#allocation16 + $0x1]]
        %v932 = vstv %s931
        %v933 = vmul.f32 %v859, %v932
        %v934 = vadd.f32 %v930, %v933
        %s935 = sld [smem:[#allocation18 + $0x1]]
        %v936 = vstv %s935
        %v937 = vadd.f32 %v934, %v936
        %s938 = sld [smem:[#allocation15 + $0x5]]
        %v939 = vstv %s938
        %v940 = vmul.f32 %v574, %v939
        %v942 = vrot.slane %v940, 5
        %v943 = vrot.slane %v942, 4
        %v945 = vadd.f32 %v937, %v943
        %s946 = sld [smem:[#allocation16 + $0x5]]
        %v947 = vstv %s946
        %v948 = vmul.f32 %v862, %v947
        %v950 = vrot.slane %v948, 5
        %v951 = vrot.slane %v950, 4
        %v953 = vadd.f32 %v945, %v951
        %s954 = sld [smem:[#allocation15 + $0x9]]
        %v955 = vstv %s954
        %v956 = vmul.f32 %v574, %v955
        %v958 = vrot.slane %v956, 6
        %v959 = vrot.slane %v958, 4
        %v961 = vadd.f32 %v953, %v959
        %s962 = sld [smem:[#allocation16 + $0x9]]
        %v963 = vstv %s962
        %v964 = vmul.f32 %v865, %v963
        %v966 = vrot.slane %v964, 6
        %v967 = vrot.slane %v966, 4
        %v969 = vadd.f32 %v961, %v967
        %s970 = sld [smem:[#allocation15 + $0xd]]
        %v971 = vstv %s970
        %v972 = vmul.f32 %v574, %v971
        %v974 = vrot.slane %v972, 7
        %v975 = vrot.slane %v974, 4
        %v977 = vadd.f32 %v969, %v975
        %s978 = sld [smem:[#allocation16 + $0xd]]
        %v979 = vstv %s978
        %v980 = vmul.f32 %v868, %v979
        %v982 = vrot.slane %v980, 7
        %v983 = vrot.slane %v982, 4
        %v985 = vadd.f32 %v977, %v983
        %v986 = vmax.f32 %v985, 0.0
        %s987 = sld [smem:[#allocation15 + $0x2]]
        %v988 = vstv %s987
        %v989 = vmul.f32 %v574, %v988
        %s990 = sld [smem:[#allocation16 + $0x2]]
        %v991 = vstv %s990
        %v992 = vmul.f32 %v859, %v991
        %v993 = vadd.f32 %v989, %v992
        %s994 = sld [smem:[#allocation18 + $0x2]]
        %v995 = vstv %s994
        %v996 = vadd.f32 %v993, %v995
        %s997 = sld [smem:[#allocation15 + $0x6]]
        %v998 = vstv %s997
        %v999 = vmul.f32 %v574, %v998
        %v1001 = vrot.slane %v999, 5
        %v1002 = vrot.slane %v1001, 4
        %v1004 = vadd.f32 %v996, %v1002
        %s1005 = sld [smem:[#allocation16 + $0x6]]
        %v1006 = vstv %s1005
        %v1007 = vmul.f32 %v862, %v1006
        %v1009 = vrot.slane %v1007, 5
        %v1010 = vrot.slane %v1009, 4
        %v1012 = vadd.f32 %v1004, %v1010
        %s1013 = sld [smem:[#allocation15 + $0xa]]
        %v1014 = vstv %s1013
        %v1015 = vmul.f32 %v574, %v1014
        %v1017 = vrot.slane %v1015, 6
        %v1018 = vrot.slane %v1017, 4
        %v1020 = vadd.f32 %v1012, %v1018
        %s1021 = sld [smem:[#allocation16 + $0xa]]
        %v1022 = vstv %s1021
        %v1023 = vmul.f32 %v865, %v1022
        %v1025 = vrot.slane %v1023, 6
        %v1026 = vrot.slane %v1025, 4
        %v1028 = vadd.f32 %v1020, %v1026
        %s1029 = sld [smem:[#allocation15 + $0xe]]
        %v1030 = vstv %s1029
        %v1031 = vmul.f32 %v574, %v1030
        %v1033 = vrot.slane %v1031, 7
        %v1034 = vrot.slane %v1033, 4
        %v1036 = vadd.f32 %v1028, %v1034
        %s1037 = sld [smem:[#allocation16 + $0xe]]
        %v1038 = vstv %s1037
        %v1039 = vmul.f32 %v868, %v1038
        %v1041 = vrot.slane %v1039, 7
        %v1042 = vrot.slane %v1041, 4
        %v1044 = vadd.f32 %v1036, %v1042
        %v1045 = vmax.f32 %v1044, 0.0
        %s1046 = sld [smem:[#allocation15 + $0x3]]
        %v1047 = vstv %s1046
        %v1048 = vmul.f32 %v574, %v1047
        %s1049 = sld [smem:[#allocation16 + $0x3]]
        %v1050 = vstv %s1049
        %v1051 = vmul.f32 %v859, %v1050
        %v1052 = vadd.f32 %v1048, %v1051
        %s1053 = sld [smem:[#allocation18 + $0x3]]
        %v1054 = vstv %s1053
        %v1055 = vadd.f32 %v1052, %v1054
        %s1056 = sld [smem:[#allocation15 + $0x7]]
        %v1057 = vstv %s1056
        %v1058 = vmul.f32 %v574, %v1057
        %v1060 = vrot.slane %v1058, 5
        %v1061 = vrot.slane %v1060, 4
        %v1063 = vadd.f32 %v1055, %v1061
        %s1064 = sld [smem:[#allocation16 + $0x7]]
        %v1065 = vstv %s1064
        %v1066 = vmul.f32 %v862, %v1065
        %v1068 = vrot.slane %v1066, 5
        %v1069 = vrot.slane %v1068, 4
        %v1071 = vadd.f32 %v1063, %v1069
        %s1072 = sld [smem:[#allocation15 + $0xb]]
        %v1073 = vstv %s1072
        %v1074 = vmul.f32 %v574, %v1073
        %v1076 = vrot.slane %v1074, 6
        %v1077 = vrot.slane %v1076, 4
        %v1079 = vadd.f32 %v1071, %v1077
        %s1080 = sld [smem:[#allocation16 + $0xb]]
        %v1081 = vstv %s1080
        %v1082 = vmul.f32 %v865, %v1081
        %v1084 = vrot.slane %v1082, 6
        %v1085 = vrot.slane %v1084, 4
        %v1087 = vadd.f32 %v1079, %v1085
        %s1088 = sld [smem:[#allocation15 + $0xf]]
        %v1089 = vstv %s1088
        %v1090 = vmul.f32 %v574, %v1089
        %v1092 = vrot.slane %v1090, 7
        %v1093 = vrot.slane %v1092, 4
        %v1095 = vadd.f32 %v1087, %v1093
        %s1096 = sld [smem:[#allocation16 + $0xf]]
        %v1097 = vstv %s1096
        %v1098 = vmul.f32 %v868, %v1097
        %v1100 = vrot.slane %v1098, 7
        %v1101 = vrot.slane %v1100, 4
        %v1103 = vadd.f32 %v1095, %v1101
        %v1104 = vmax.f32 %v1103, 0.0
        %v1106 = vperm.slane %v927, 0
        %v1107 = vperm.slane %v927, 4
        %v1111 = vperm.slane %v986, 0
        %v1112 = vperm.slane %v986, 4
        %v1116 = vperm.slane %v1045, 0
        %v1117 = vperm.slane %v1045, 4
        %v1121 = vperm.slane %v1104, 0
        %v1122 = vperm.slane %v1104, 4
        %v1125 = vsel %vm851, %v1106, %v1111
        %v1126 = vsel %vm851, %v1107, %v1112
        %vm1127 = vcmask 1041408
        %v1128 = vsel %vm1127, %v1125, %v1116
        %v1129 = vsel %vm1127, %v1126, %v1117
        %vm1130 = vcmask 1042432
        %v1131 = vsel %vm1130, %v1128, %v1121
        %v1132 = vsel %vm1130, %v1129, %v1122
        %v1135 = vrot.slane %v1132, 4
        %vm1136 = vcmask 1043456
        %v1137 = vsel %vm1136, %v1131, %v1135
        %1139 = vst [vmem:[%s562] sm:$0xff] %v1137
        %s1140 = sand.u32 %s286, 1
        %s1141 = scalar_lea.sflag [#allocation5], %s1140
        %s1142 = sand.u32 %s286, 1
        %s1143 = smul.addr %s1142, 8
        %s1144 = scalar_lea.vmem [#allocation19], %s1143
        %s1145 = sand.u32 %s314, 1
        %s1146 = scalar_lea.sflag [#allocation21], %s1145
        %s1147 = sand.u32 %s314, 1
        %s1148 = smul.addr %s1147, 2
        %s1149 = scalar_lea.vmem [#allocation20], %s1148
        // Predicated region
        $region97: #{tpu_custom_call.1} parent=59 // pred_check
          %p1150 = pneg %p296
        $region98: #{tpu_custom_call.1} parent=59 // pred_check_branch
          %1152 = sbr.rel (%p1150) target = $region100
        $region99: #{tpu_custom_call.1} parent=59 // pred_region
          %s1153 = smul.u32 2, %s45
          %1155 = vsyncadd %s1141, 0
          %s1156 = smul.addr %s44, 2
          %s1157 = sadd.s32 %s1153, %s1156
          %s1158 = smul.addr %s1157, 4
          %s1159 = scalar_lea.hbm %s10, %s1158
          %s1161 = sshll.u32 %s1144, 4
          %s1162 = int_to_ptr.vmem [resolvable:$true] %s1161
          %s1163 = sshll.u32 %s1159, 4
          %s1164 = int_to_ptr.hbm [resolvable:$true] %s1163
          %1166 = dma.vmem_to_hbm [thread:$0]  %s1162, 128, %s1164, %s1141
        $region100: #{tpu_custom_call.1} parent=59 // pred_fallthru
          _
        // Predicated region
        $region101: #{tpu_custom_call.1} parent=59 // pred_check
          %p1167 = pneg %p324
        $region102: #{tpu_custom_call.1} parent=59 // pred_check_branch
          %1169 = sbr.rel (%p1167) target = $region104
        $region103: #{tpu_custom_call.1} parent=59 // pred_region
          %s1170 = smul.u32 2, %s45
          %1172 = vsyncadd %s1146, 0
          %s1173 = smul.addr %s44, 2
          %s1174 = sadd.s32 %s1170, %s1173
          %s1175 = scalar_lea.hbm %s11, %s1174
          %s1177 = sshll.u32 %s1149, 4
          %s1178 = int_to_ptr.vmem [resolvable:$true] %s1177
          %s1179 = sshll.u32 %s1175, 4
          %s1180 = int_to_ptr.hbm [resolvable:$true] %s1179
          %1182 = dma.vmem_to_hbm [thread:$0]  %s1178, 32, %s1180, %s1146
        $region104: #{tpu_custom_call.1} parent=59 // pred_fallthru
          _
      $region60: #{tpu_custom_call.1} parent=5 // pred_fallthru
        _
      %p1183 = scmp.le.s32.totalorder 2, %s35
      // Predicated region
      $region105: #{tpu_custom_call.1} parent=5 // pred_check
        %p1184 = pneg %p1183
      $region106: #{tpu_custom_call.1} parent=5 // pred_check_branch
        %1186 = sbr.rel (%p1184) target = $region108
      $region107: #{tpu_custom_call.1} parent=5 // pred_region
        %s1187 = ssub.s32 %s35, 2
        // Predicated region
        $region109: #{tpu_custom_call.1} parent=107 // pred_check
          %p1188 = pneg %p302
        $region110: #{tpu_custom_call.1} parent=107 // pred_check_branch
          %1190 = sbr.rel (%p1188) target = $region112
        $region111: #{tpu_custom_call.1} parent=107 // pred_region
          %s1191 = sand.u32 %s287, 1
          %s1192 = scalar_lea.sflag [#allocation5], %s1191
          %s1193 = sand.u32 %s287, 1
          %s1194 = smul.addr %s1193, 8
          %s1195 = scalar_lea.vmem [#allocation19], %s1194
          %1197 = dma.done %s1192, 128
        $region112: #{tpu_custom_call.1} parent=107 // pred_fallthru
          _
        // Predicated region
        $region113: #{tpu_custom_call.1} parent=107 // pred_check
          %p1198 = pneg %p330
        $region114: #{tpu_custom_call.1} parent=107 // pred_check_branch
          %1200 = sbr.rel (%p1198) target = $region116
        $region115: #{tpu_custom_call.1} parent=107 // pred_region
          %s1201 = sand.u32 %s315, 1
          %s1202 = scalar_lea.sflag [#allocation21], %s1201
          %s1203 = sand.u32 %s315, 1
          %s1204 = smul.addr %s1203, 2
          %s1205 = scalar_lea.vmem [#allocation20], %s1204
          %1207 = dma.done %s1202, 32
        $region116: #{tpu_custom_call.1} parent=107 // pred_fallthru
          _
      $region108: #{tpu_custom_call.1} parent=5 // pred_fallthru
        _
    $region6: #{tpu_custom_call.1} parent=1 // loop_footer
      %s39 = sadd.s32 1, %s35
    $region7: #{tpu_custom_call.1} parent=1 // loop_footer_branch
      %34 = sbr.rel target = $region3
    $region8: #{tpu_custom_call.1} parent=1 // loop_exit
      _
    %1208 = vsyncpa [#allocation4], 1
    %s1209 = scalar_lea.sflag [#allocation4], 1
    %1210 = vsyncpa %s1209, 1
    %1211 = vsyncpa [#allocation8], 1
    %s1212 = scalar_lea.sflag [#allocation8], 1
    %1213 = vsyncpa %s1212, 1
    %1214 = vsyncpa [#allocation5], 1
    %s1215 = scalar_lea.sflag [#allocation5], 1
    %1216 = vsyncpa %s1215, 1
    %1217 = vsyncpa [#allocation21], 1
    %s1218 = scalar_lea.sflag [#allocation21], 1
    %1219 = vsyncpa %s1218, 1
    %1220 = vsyncpa [#allocation6], 1
    %s1221 = scalar_lea.sflag [#allocation6], 1
    %1222 = vsyncpa %s1221, 1
    %1223 = vsyncpa [#allocation11], 1
    %1224 = vsyncpa [#allocation14], 1
    %1225 = vsyncpa [#allocation17], 1

</llo_original>
